<compile_context>
chip_gen: v6e
topology: v6e:2x2x1
jax: 0.10.0
libtpu: 0.0.40
codegen_flags: <defaults>
</compile_context>

<pallas_src>
import math

import jax
import jax.numpy as jnp
from jax.experimental import pallas as pl
from jax.experimental.pallas import tpu as pltpu


def _round_up(a, b):
    return ((a + b - 1) // b) * b


def _cdiv(a, b):
    return (a + b - 1) // b


def _make_kernel(pack, tile_m, tile_nodes, n_nodes, compute_dtype):
    def kernel(x_ref, p_ref, w1_ref, w2_ref, b_ref, o_ref):
        base = pl.program_id(0) * tile_nodes
        row0 = jax.lax.broadcasted_iota(jnp.int32, (tile_m, 1), 0) * pack
        acc = jnp.zeros(o_ref.shape, jnp.float32)
        for j in range(pack):  # trace-time unrolled; pack is a Python int
            if pack == 1:
                xj = x_ref[...]
                pj = p_ref[...]
            else:
                # Packed row r of this tile holds nodes pack*r + j, j=0..pack-1.
                xj = x_ref[pl.ds(j, tile_m, stride=pack), :]
                pj = p_ref[pl.ds(j, tile_m, stride=pack), :]
            # Mask rows past N: stale VMEM in a partial last block could be
            # NaN/Inf, and NaN * 0-weight-column would pollute valid columns.
            valid = (base + row0 + j) < n_nodes
            xj = jnp.where(valid, xj, 0.0).astype(compute_dtype)
            pj = jnp.where(valid, pj, 0.0).astype(compute_dtype)
            acc = acc + jnp.dot(xj, w1_ref[j], preferred_element_type=jnp.float32)
            acc = acc + jnp.dot(pj, w2_ref[j], preferred_element_type=jnp.float32)
        o_ref[...] = (acc + b_ref[...]).astype(o_ref.dtype)

    return kernel


def concat_node_encoder(x, pestat, w1, b1, w2, b2, *, tile_nodes=8192,
                        compute_dtype=jnp.float32, out_dtype=jnp.float32):
    """Fused LinearNodeEncoder + RWSE linear head + concat."""
    N, f_in = x.shape
    assert pestat.shape[0] == N
    k = pestat.shape[1]
    d1 = w1.shape[1]
    dim_pe = w2.shape[1]
    dim_emb = d1 + dim_pe

    # Lane-dense output: pack enough nodes per row that kout is a multiple of 128.
    pack = 128 // math.gcd(dim_emb, 128)
    kout = pack * dim_emb

    # --- one-time parameter prep (tiny; outside the kernel) -----------------
    # Per-slot column-placed weights: slot j writes columns [j*dim_emb, (j+1)*dim_emb).
    w1p = jnp.zeros((pack, f_in, kout), jnp.float32)
    w2p = jnp.zeros((pack, k, kout), jnp.float32)
    for j in range(pack):
        w1p = w1p.at[j, :, j * dim_emb:j * dim_emb + d1].set(w1.astype(jnp.float32))
        w2p = w2p.at[j, :, j * dim_emb + d1:(j + 1) * dim_emb].set(w2.astype(jnp.float32))
    w1p = w1p.astype(compute_dtype)
    w2p = w2p.astype(compute_dtype)
    b_big = jnp.tile(
        jnp.concatenate([jnp.reshape(b1, (1, d1)), jnp.reshape(b2, (1, dim_pe))],
                        axis=-1).astype(jnp.float32),
        (1, pack))

    # --- tiling (no padding / relayout of the big node arrays) --------------
    rows_out = _cdiv(N, pack)
    unit = pack * 8  # node granularity that keeps packed rows sublane-aligned

    # VMEM budget: narrow inputs lane-pad to 128 in VMEM; everything is
    # double-buffered. 24 MiB streaming budget is safe on v5e/v6e/v7x.
    per_node_vmem = 8 * (_round_up(f_in, 128) + _round_up(k, 128) + dim_emb)
    vmem_cap_nodes = max(unit, ((24 * 1024 * 1024) // per_node_vmem) // unit * unit)
    # >= 2 grid steps for moderate N so both v7x TensorCores get work.
    half_n = max(unit, _round_up(_cdiv(N, 2), unit))
    tile_nodes = max(unit, min(_round_up(tile_nodes, unit), vmem_cap_nodes, half_n))
    tile_m = tile_nodes // pack
    grid = (_cdiv(rows_out, tile_m),)

    kernel = _make_kernel(pack, tile_m, tile_nodes, N, compute_dtype)

    out_packed = pl.pallas_call(
        kernel,
        out_shape=jax.ShapeDtypeStruct((rows_out, kout), out_dtype),
        grid_spec=pltpu.PrefetchScalarGridSpec(
            num_scalar_prefetch=0,
            grid=grid,
            in_specs=[
                pl.BlockSpec((tile_nodes, f_in), lambda i: (i, 0)),   # raw node feats
                pl.BlockSpec((tile_nodes, k), lambda i: (i, 0)),      # raw pestat
                pl.BlockSpec((pack, f_in, kout), lambda i: (0, 0, 0)),  # resident W1 slots
                pl.BlockSpec((pack, k, kout), lambda i: (0, 0, 0)),     # resident W2 slots
                pl.BlockSpec((1, kout), lambda i: (0, 0)),              # resident bias
            ],
            out_specs=pl.BlockSpec((tile_m, kout), lambda i: (i, 0)),
        ),
        compiler_params=pltpu.CompilerParams(
            dimension_semantics=("parallel",),
            vmem_limit_bytes=32 * 1024 * 1024,
        ),
    )(x, pestat, w1p, w2p, b_big)

    # Consecutive-node packing -> row-major reshape recovers [N, dim_emb];
    # trailing garbage (pad) entries are sliced off.
    return out_packed.reshape(rows_out * pack, dim_emb)[:N]


def reference(x, pestat, w1, b1, w2, b2):
    hp = jax.lax.Precision.HIGHEST
    h = jnp.dot(x, w1, precision=hp) + b1
    pe = jnp.dot(pestat, w2, precision=hp) + b2
    return jnp.concatenate([h, pe], axis=-1)


if __name__ == "__main__":
    key = jax.random.PRNGKey(0)
    N = 200          # number of nodes (deliberately NOT a multiple of the tile)
    F_IN = 16        # raw node feature width
    DIM_EMB = 32     # total embedding dim
    DIM_PE = 8       # posenc_RWSE.dim_pe
    K = 20           # number of random-walk steps (pestat width)
    D1 = DIM_EMB - DIM_PE

    kx, kp, kw1, kb1, kw2, kb2 = jax.random.split(key, 6)
    x = jax.random.normal(kx, (N, F_IN), dtype=jnp.float32)
    pestat = jax.random.normal(kp, (N, K), dtype=jnp.float32)
    # Deterministic synthetic parameters (no checkpoint loading).
    w1 = jax.random.normal(kw1, (F_IN, D1), dtype=jnp.float32) * 0.1
    b1 = jax.random.normal(kb1, (1, D1), dtype=jnp.float32) * 0.1
    w2 = jax.random.normal(kw2, (K, DIM_PE), dtype=jnp.float32) * 0.1
    b2 = jax.random.normal(kb2, (1, DIM_PE), dtype=jnp.float32) * 0.1

    out = concat_node_encoder(x, pestat, w1, b1, w2, b2)
    out = jax.block_until_ready(out)

    ref = reference(x, pestat, w1, b1, w2, b2)
    assert out.shape == (N, DIM_EMB)
    # Tolerance covers MXU f32 pass-precision vs the HIGHEST-precision XLA
    # reference; any structural bug (wrong columns/order/bias) is >> 3e-3.
    assert jnp.allclose(out, ref, atol=3e-3, rtol=3e-3), "mismatch vs reference"
    print("KERNEL_OK")
</pallas_src>

<mosaic_0001>
module attributes {stable_mosaic.version = 11 : i64} {
  func.func @kernel(%arg0: i32, %arg1: memref<128x16xf32, #tpu.memory_space<vmem>>, %arg2: memref<128x20xf32, #tpu.memory_space<vmem>>, %arg3: memref<4x16x128xf32, #tpu.memory_space<vmem>>, %arg4: memref<4x20x128xf32, #tpu.memory_space<vmem>>, %arg5: memref<1x128xf32, #tpu.memory_space<vmem>>, %arg6: memref<32x128xf32, #tpu.memory_space<vmem>>) attributes {dimension_semantics = [#tpu.dimension_semantics<parallel>], iteration_bounds = array<i64: 2>, scalar_prefetch = 0 : i64, scratch_operands = 0 : i64, tpu.core_type = #tpu.core_type<tc>, window_params = [{transform_indices = @transform_0, window_bounds = array<i64: 128, 16>}, {transform_indices = @transform_1, window_bounds = array<i64: 128, 20>}, {pipeline_mode = #tpu.pipeline_mode<synchronous>, transform_indices = @transform_2, window_bounds = array<i64: 4, 16, 128>}, {pipeline_mode = #tpu.pipeline_mode<synchronous>, transform_indices = @transform_3, window_bounds = array<i64: 4, 20, 128>}, {pipeline_mode = #tpu.pipeline_mode<synchronous>, transform_indices = @transform_4, window_bounds = array<i64: 1, 128>}, {transform_indices = @transform_5, window_bounds = array<i64: 32, 128>}]} {
    %c128_i32 = arith.constant 128 : i32
    %0 = arith.muli %arg0, %c128_i32 : i32
    %1 = tpu.iota {dimensions = array<i32: 0>} : vector<32x1xi32>
    %c4_i32 = arith.constant 4 : i32
    %2 = vector.broadcast %c4_i32 : i32 to vector<32x1xi32>
    %3 = arith.muli %1, %2 : vector<32x1xi32>
    %cst = arith.constant 0.000000e+00 : f32
    %4 = vector.broadcast %cst : f32 to vector<32x128xf32>
    %c0 = arith.constant 0 : index
    %c0_0 = arith.constant 0 : index
    %5 = tpu.strided_load %arg1[%c0, %c0_0] {strides = array<i32: 4, 1>} : memref<128x16xf32, #tpu.memory_space<vmem>>, vector<32x16xf32>
    %c0_1 = arith.constant 0 : index
    %c0_2 = arith.constant 0 : index
    %6 = tpu.strided_load %arg2[%c0_1, %c0_2] {strides = array<i32: 4, 1>} : memref<128x20xf32, #tpu.memory_space<vmem>>, vector<32x20xf32>
    %7 = vector.broadcast %0 : i32 to vector<32x1xi32>
    %8 = arith.addi %7, %3 : vector<32x1xi32>
    %c0_i32 = arith.constant 0 : i32
    %9 = vector.broadcast %c0_i32 : i32 to vector<32x1xi32>
    %10 = arith.addi %8, %9 : vector<32x1xi32>
    %c200_i32 = arith.constant 200 : i32
    %11 = vector.broadcast %c200_i32 : i32 to vector<32x1xi32>
    %12 = arith.cmpi slt, %10, %11 : vector<32x1xi32>
    %cst_3 = arith.constant 0.000000e+00 : f32
    %13 = vector.shape_cast %12 : vector<32x1xi1> to vector<32x1xi1>
    %14 = vector.broadcast %13 : vector<32x1xi1> to vector<32x16xi1>
    %15 = vector.broadcast %cst_3 : f32 to vector<32x16xf32>
    %16 = arith.select %14, %5, %15 : vector<32x16xi1>, vector<32x16xf32>
    %cst_4 = arith.constant 0.000000e+00 : f32
    %17 = vector.shape_cast %12 : vector<32x1xi1> to vector<32x1xi1>
    %18 = vector.broadcast %17 : vector<32x1xi1> to vector<32x20xi1>
    %19 = vector.broadcast %cst_4 : f32 to vector<32x20xf32>
    %20 = arith.select %18, %6, %19 : vector<32x20xi1>, vector<32x20xf32>
    %c0_5 = arith.constant 0 : index
    %c0_6 = arith.constant 0 : index
    %c0_7 = arith.constant 0 : index
    %21 = vector.load %arg3[%c0_5, %c0_6, %c0_7] : memref<4x16x128xf32, #tpu.memory_space<vmem>>, vector<1x16x128xf32>
    %22 = vector.shape_cast %21 : vector<1x16x128xf32> to vector<16x128xf32>
    %cst_8 = arith.constant dense<0.000000e+00> : vector<32x128xf32>
    %23 = tpu.matmul %16, %22, %cst_8 {dimension_numbers = #tpu.dot_dimension_numbers<[1], [0], [0], [1], [0, 0, 1, 1], [], []>} : vector<32x16xf32>, vector<16x128xf32>, vector<32x128xf32> -> vector<32x128xf32>
    %24 = arith.addf %4, %23 : vector<32x128xf32>
    %c0_9 = arith.constant 0 : index
    %c0_10 = arith.constant 0 : index
    %c0_11 = arith.constant 0 : index
    %25 = vector.load %arg4[%c0_9, %c0_10, %c0_11] : memref<4x20x128xf32, #tpu.memory_space<vmem>>, vector<1x20x128xf32>
    %26 = vector.shape_cast %25 : vector<1x20x128xf32> to vector<20x128xf32>
    %cst_12 = arith.constant dense<0.000000e+00> : vector<32x128xf32>
    %27 = tpu.matmul %20, %26, %cst_12 {dimension_numbers = #tpu.dot_dimension_numbers<[1], [0], [0], [1], [0, 0, 1, 1], [], []>} : vector<32x20xf32>, vector<20x128xf32>, vector<32x128xf32> -> vector<32x128xf32>
    %28 = arith.addf %24, %27 : vector<32x128xf32>
    %c1 = arith.constant 1 : index
    %c0_13 = arith.constant 0 : index
    %29 = tpu.strided_load %arg1[%c1, %c0_13] {strides = array<i32: 4, 1>} : memref<128x16xf32, #tpu.memory_space<vmem>>, vector<32x16xf32>
    %c1_14 = arith.constant 1 : index
    %c0_15 = arith.constant 0 : index
    %30 = tpu.strided_load %arg2[%c1_14, %c0_15] {strides = array<i32: 4, 1>} : memref<128x20xf32, #tpu.memory_space<vmem>>, vector<32x20xf32>
    %31 = vector.broadcast %0 : i32 to vector<32x1xi32>
    %32 = arith.addi %31, %3 : vector<32x1xi32>
    %c1_i32 = arith.constant 1 : i32
    %33 = vector.broadcast %c1_i32 : i32 to vector<32x1xi32>
    %34 = arith.addi %32, %33 : vector<32x1xi32>
    %c200_i32_16 = arith.constant 200 : i32
    %35 = vector.broadcast %c200_i32_16 : i32 to vector<32x1xi32>
    %36 = arith.cmpi slt, %34, %35 : vector<32x1xi32>
    %cst_17 = arith.constant 0.000000e+00 : f32
    %37 = vector.shape_cast %36 : vector<32x1xi1> to vector<32x1xi1>
    %38 = vector.broadcast %37 : vector<32x1xi1> to vector<32x16xi1>
    %39 = vector.broadcast %cst_17 : f32 to vector<32x16xf32>
    %40 = arith.select %38, %29, %39 : vector<32x16xi1>, vector<32x16xf32>
    %cst_18 = arith.constant 0.000000e+00 : f32
    %41 = vector.shape_cast %36 : vector<32x1xi1> to vector<32x1xi1>
    %42 = vector.broadcast %41 : vector<32x1xi1> to vector<32x20xi1>
    %43 = vector.broadcast %cst_18 : f32 to vector<32x20xf32>
    %44 = arith.select %42, %30, %43 : vector<32x20xi1>, vector<32x20xf32>
    %c1_19 = arith.constant 1 : index
    %c0_20 = arith.constant 0 : index
    %c0_21 = arith.constant 0 : index
    %45 = vector.load %arg3[%c1_19, %c0_20, %c0_21] : memref<4x16x128xf32, #tpu.memory_space<vmem>>, vector<1x16x128xf32>
    %46 = vector.shape_cast %45 : vector<1x16x128xf32> to vector<16x128xf32>
    %cst_22 = arith.constant dense<0.000000e+00> : vector<32x128xf32>
    %47 = tpu.matmul %40, %46, %cst_22 {dimension_numbers = #tpu.dot_dimension_numbers<[1], [0], [0], [1], [0, 0, 1, 1], [], []>} : vector<32x16xf32>, vector<16x128xf32>, vector<32x128xf32> -> vector<32x128xf32>
    %48 = arith.addf %28, %47 : vector<32x128xf32>
    %c1_23 = arith.constant 1 : index
    %c0_24 = arith.constant 0 : index
    %c0_25 = arith.constant 0 : index
    %49 = vector.load %arg4[%c1_23, %c0_24, %c0_25] : memref<4x20x128xf32, #tpu.memory_space<vmem>>, vector<1x20x128xf32>
    %50 = vector.shape_cast %49 : vector<1x20x128xf32> to vector<20x128xf32>
    %cst_26 = arith.constant dense<0.000000e+00> : vector<32x128xf32>
    %51 = tpu.matmul %44, %50, %cst_26 {dimension_numbers = #tpu.dot_dimension_numbers<[1], [0], [0], [1], [0, 0, 1, 1], [], []>} : vector<32x20xf32>, vector<20x128xf32>, vector<32x128xf32> -> vector<32x128xf32>
    %52 = arith.addf %48, %51 : vector<32x128xf32>
    %c2 = arith.constant 2 : index
    %c0_27 = arith.constant 0 : index
    %53 = tpu.strided_load %arg1[%c2, %c0_27] {strides = array<i32: 4, 1>} : memref<128x16xf32, #tpu.memory_space<vmem>>, vector<32x16xf32>
    %c2_28 = arith.constant 2 : index
    %c0_29 = arith.constant 0 : index
    %54 = tpu.strided_load %arg2[%c2_28, %c0_29] {strides = array<i32: 4, 1>} : memref<128x20xf32, #tpu.memory_space<vmem>>, vector<32x20xf32>
    %55 = vector.broadcast %0 : i32 to vector<32x1xi32>
    %56 = arith.addi %55, %3 : vector<32x1xi32>
    %c2_i32 = arith.constant 2 : i32
    %57 = vector.broadcast %c2_i32 : i32 to vector<32x1xi32>
    %58 = arith.addi %56, %57 : vector<32x1xi32>
    %c200_i32_30 = arith.constant 200 : i32
    %59 = vector.broadcast %c200_i32_30 : i32 to vector<32x1xi32>
    %60 = arith.cmpi slt, %58, %59 : vector<32x1xi32>
    %cst_31 = arith.constant 0.000000e+00 : f32
    %61 = vector.shape_cast %60 : vector<32x1xi1> to vector<32x1xi1>
    %62 = vector.broadcast %61 : vector<32x1xi1> to vector<32x16xi1>
    %63 = vector.broadcast %cst_31 : f32 to vector<32x16xf32>
    %64 = arith.select %62, %53, %63 : vector<32x16xi1>, vector<32x16xf32>
    %cst_32 = arith.constant 0.000000e+00 : f32
    %65 = vector.shape_cast %60 : vector<32x1xi1> to vector<32x1xi1>
    %66 = vector.broadcast %65 : vector<32x1xi1> to vector<32x20xi1>
    %67 = vector.broadcast %cst_32 : f32 to vector<32x20xf32>
    %68 = arith.select %66, %54, %67 : vector<32x20xi1>, vector<32x20xf32>
    %c2_33 = arith.constant 2 : index
    %c0_34 = arith.constant 0 : index
    %c0_35 = arith.constant 0 : index
    %69 = vector.load %arg3[%c2_33, %c0_34, %c0_35] : memref<4x16x128xf32, #tpu.memory_space<vmem>>, vector<1x16x128xf32>
    %70 = vector.shape_cast %69 : vector<1x16x128xf32> to vector<16x128xf32>
    %cst_36 = arith.constant dense<0.000000e+00> : vector<32x128xf32>
    %71 = tpu.matmul %64, %70, %cst_36 {dimension_numbers = #tpu.dot_dimension_numbers<[1], [0], [0], [1], [0, 0, 1, 1], [], []>} : vector<32x16xf32>, vector<16x128xf32>, vector<32x128xf32> -> vector<32x128xf32>
    %72 = arith.addf %52, %71 : vector<32x128xf32>
    %c2_37 = arith.constant 2 : index
    %c0_38 = arith.constant 0 : index
    %c0_39 = arith.constant 0 : index
    %73 = vector.load %arg4[%c2_37, %c0_38, %c0_39] : memref<4x20x128xf32, #tpu.memory_space<vmem>>, vector<1x20x128xf32>
    %74 = vector.shape_cast %73 : vector<1x20x128xf32> to vector<20x128xf32>
    %cst_40 = arith.constant dense<0.000000e+00> : vector<32x128xf32>
    %75 = tpu.matmul %68, %74, %cst_40 {dimension_numbers = #tpu.dot_dimension_numbers<[1], [0], [0], [1], [0, 0, 1, 1], [], []>} : vector<32x20xf32>, vector<20x128xf32>, vector<32x128xf32> -> vector<32x128xf32>
    %76 = arith.addf %72, %75 : vector<32x128xf32>
    %c3 = arith.constant 3 : index
    %c0_41 = arith.constant 0 : index
    %77 = tpu.strided_load %arg1[%c3, %c0_41] {strides = array<i32: 4, 1>} : memref<128x16xf32, #tpu.memory_space<vmem>>, vector<32x16xf32>
    %c3_42 = arith.constant 3 : index
    %c0_43 = arith.constant 0 : index
    %78 = tpu.strided_load %arg2[%c3_42, %c0_43] {strides = array<i32: 4, 1>} : memref<128x20xf32, #tpu.memory_space<vmem>>, vector<32x20xf32>
    %79 = vector.broadcast %0 : i32 to vector<32x1xi32>
    %80 = arith.addi %79, %3 : vector<32x1xi32>
    %c3_i32 = arith.constant 3 : i32
    %81 = vector.broadcast %c3_i32 : i32 to vector<32x1xi32>
    %82 = arith.addi %80, %81 : vector<32x1xi32>
    %c200_i32_44 = arith.constant 200 : i32
    %83 = vector.broadcast %c200_i32_44 : i32 to vector<32x1xi32>
    %84 = arith.cmpi slt, %82, %83 : vector<32x1xi32>
    %cst_45 = arith.constant 0.000000e+00 : f32
    %85 = vector.shape_cast %84 : vector<32x1xi1> to vector<32x1xi1>
    %86 = vector.broadcast %85 : vector<32x1xi1> to vector<32x16xi1>
    %87 = vector.broadcast %cst_45 : f32 to vector<32x16xf32>
    %88 = arith.select %86, %77, %87 : vector<32x16xi1>, vector<32x16xf32>
    %cst_46 = arith.constant 0.000000e+00 : f32
    %89 = vector.shape_cast %84 : vector<32x1xi1> to vector<32x1xi1>
    %90 = vector.broadcast %89 : vector<32x1xi1> to vector<32x20xi1>
    %91 = vector.broadcast %cst_46 : f32 to vector<32x20xf32>
    %92 = arith.select %90, %78, %91 : vector<32x20xi1>, vector<32x20xf32>
    %c3_47 = arith.constant 3 : index
    %c0_48 = arith.constant 0 : index
    %c0_49 = arith.constant 0 : index
    %93 = vector.load %arg3[%c3_47, %c0_48, %c0_49] : memref<4x16x128xf32, #tpu.memory_space<vmem>>, vector<1x16x128xf32>
    %94 = vector.shape_cast %93 : vector<1x16x128xf32> to vector<16x128xf32>
    %cst_50 = arith.constant dense<0.000000e+00> : vector<32x128xf32>
    %95 = tpu.matmul %88, %94, %cst_50 {dimension_numbers = #tpu.dot_dimension_numbers<[1], [0], [0], [1], [0, 0, 1, 1], [], []>} : vector<32x16xf32>, vector<16x128xf32>, vector<32x128xf32> -> vector<32x128xf32>
    %96 = arith.addf %76, %95 : vector<32x128xf32>
    %c3_51 = arith.constant 3 : index
    %c0_52 = arith.constant 0 : index
    %c0_53 = arith.constant 0 : index
    %97 = vector.load %arg4[%c3_51, %c0_52, %c0_53] : memref<4x20x128xf32, #tpu.memory_space<vmem>>, vector<1x20x128xf32>
    %98 = vector.shape_cast %97 : vector<1x20x128xf32> to vector<20x128xf32>
    %cst_54 = arith.constant dense<0.000000e+00> : vector<32x128xf32>
    %99 = tpu.matmul %92, %98, %cst_54 {dimension_numbers = #tpu.dot_dimension_numbers<[1], [0], [0], [1], [0, 0, 1, 1], [], []>} : vector<32x20xf32>, vector<20x128xf32>, vector<32x128xf32> -> vector<32x128xf32>
    %100 = arith.addf %96, %99 : vector<32x128xf32>
    %c0_55 = arith.constant 0 : index
    %c0_56 = arith.constant 0 : index
    %101 = vector.load %arg5[%c0_55, %c0_56] : memref<1x128xf32, #tpu.memory_space<vmem>>, vector<1x128xf32>
    %102 = vector.broadcast %101 : vector<1x128xf32> to vector<32x128xf32>
    %103 = arith.addf %100, %102 : vector<32x128xf32>
    %c0_57 = arith.constant 0 : index
    %c0_58 = arith.constant 0 : index
    %104 = vector.load %arg6[%c0_57, %c0_58] : memref<32x128xf32, #tpu.memory_space<vmem>>, vector<32x128xf32>
    tpu.vector_store %arg6[%c0_57, %c0_58], %103 {strides = array<i32>} : memref<32x128xf32, #tpu.memory_space<vmem>>, vector<32x128xf32>,
    return
  }
  func.func @transform_0(%arg0: i32) -> (i32, i32) {
    %c0_i32 = arith.constant 0 : i32
    %c0_i32_0 = arith.constant 0 : i32
    return %arg0, %c0_i32 : i32, i32
  }
  func.func @transform_1(%arg0: i32) -> (i32, i32) {
    %c0_i32 = arith.constant 0 : i32
    %c0_i32_0 = arith.constant 0 : i32
    return %arg0, %c0_i32 : i32, i32
  }
  func.func @transform_2(%arg0: i32) -> (i32, i32, i32) {
    %c0_i32 = arith.constant 0 : i32
    %c0_i32_0 = arith.constant 0 : i32
    %c0_i32_1 = arith.constant 0 : i32
    %c0_i32_2 = arith.constant 0 : i32
    return %c0_i32, %c0_i32_0, %c0_i32_1 : i32, i32, i32
  }
  func.func @transform_3(%arg0: i32) -> (i32, i32, i32) {
    %c0_i32 = arith.constant 0 : i32
    %c0_i32_0 = arith.constant 0 : i32
    %c0_i32_1 = arith.constant 0 : i32
    %c0_i32_2 = arith.constant 0 : i32
    return %c0_i32, %c0_i32_0, %c0_i32_1 : i32, i32, i32
  }
  func.func @transform_4(%arg0: i32) -> (i32, i32) {
    %c0_i32 = arith.constant 0 : i32
    %c0_i32_0 = arith.constant 0 : i32
    %c0_i32_1 = arith.constant 0 : i32
    return %c0_i32, %c0_i32_0 : i32, i32
  }
  func.func @transform_5(%arg0: i32) -> (i32, i32) {
    %c0_i32 = arith.constant 0 : i32
    %c0_i32_0 = arith.constant 0 : i32
    return %arg0, %c0_i32 : i32, i32
  }
}

</mosaic_0001>

<llo_original>
// kernel: tpu_custom_call.1
$region0: #{tpu_custom_call.1}
  #allocation0 [shape = 'u32[]', space=smem, size = 0x4, offset = 0x4, fixed_abs, tag = 'smem constant byte address 0x4 - core index']
  #allocation1 [shape = 'u32[144,128]{1,0:T(1,128)}', space=vmem, size = 0x12000, scoped, tag = 'internal scratch']
  %s0 = inlined_call_operand.vmem [shape: f32[200,16], index: 0, kind: input, shape index: {}]
  %s1 = inlined_call_operand.vmem [shape: f32[200,20], index: 1, kind: input, shape index: {}]
  %s2 = inlined_call_operand.vmem [shape: f32[4,16,128], index: 2, kind: input, shape index: {}]
  %s3 = inlined_call_operand.vmem [shape: f32[4,20,128], index: 3, kind: input, shape index: {}]
  %s4 = inlined_call_operand.vmem [shape: f32[1,128], index: 4, kind: input, shape index: {}]
  %s5 = inlined_call_operand.hbm [shape: f32[50,128], index: 5, kind: output, shape index: {}]
  %s6 = sld [smem:[#allocation0]]
  $region53: #{tpu_custom_call.1} parent=0
    _
  %s8 = ssub.s32 1, %s6
  %s9 = scalar_select 0, %s8, %s6
  $region1: #{tpu_custom_call.1} parent=0
    #allocation2 [shape = 'u8[32768]{0}', space=vmem, size = 0x8000, scoped, tag = 'output window, operand 0']
    #allocation3 [shape = 's32[2]{0}', space=sflag, size = 0x8, scoped, tag = 'scoped memory for tpu_custom_call.1']
    %10 = vsyncpa [#allocation3], 0
    %s11 = scalar_lea.sflag [#allocation3], 1
    %12 = vsyncpa %s11, 0
    loop: start=0, step=1, limit=4
    $region2: #{tpu_custom_call.1} parent=1 // loop_pre_header
      _
    $region3: #{tpu_custom_call.1} parent=1 // loop_header
      %s14 = sphi 0, %s18
      %p15 = scmp.ge.s32.totalorder %s14, 4
      %s24 = sphi 0, %s26
      %s27 = sphi 0, %s24
      %s28 = sphi 0, %s27
      %s44 = sphi 0, %s28
      %s50 = sphi 0, %s52
      %s53 = sphi 0, %s50
      %s54 = sphi 0, %s53
      %s70 = sphi 0, %s54
      %s74 = sphi 0, %s74
      %s76 = sphi 0, %s74
      %s77 = sphi 0, %s76
      %s91 = sphi 0, %s77
      %s95 = sphi 0, %s95
      %s97 = sphi 0, %s95
      %s98 = sphi 0, %s97
      %s112 = sphi 0, %s98
      %s116 = sphi 0, %s116
      %s118 = sphi 0, %s116
      %s119 = sphi 0, %s118
      %s133 = sphi 0, %s119
      %s139 = sphi 0, %s141
      %s142 = sphi 0, %s139
      %s143 = sphi 0, %s142
      %s159 = sphi 0, %s143
    $region4: #{tpu_custom_call.1} parent=1 // loop_header_branch
      %17 = sbr.rel (%p15) target = $region8
    $region5: #{tpu_custom_call.1} parent=1 // loop_body
      %s19 = ssub.s32 %s14, 1
      %s20 = ssub.s32 %s14, 2
      %s21 = sadd.s32 %s14, 1
      %s22 = ssub.s32 %s14, %s21
      %p23 = scmp.eq.s32.totalorder %s22, 0
      %s25 = sadd.s32 %s24, 1
      %s26 = scalar_select %p23, %s24, %s25
      %p29 = pneg %p23
      %p30 = scmp.eq.s32.totalorder %s14, 1
      %p31 = por %p29, %p30
      %p32 = scmp.ne.s32.totalorder %s24, %s27
      %p33 = scmp.eq.s32.totalorder %s14, 0
      %p34 = por %p32, %p33
      %p35 = scmp.ne.s32.totalorder %s24, %s27
      %p36 = scmp.eq.s32.totalorder %s19, 1
      %p37 = por %p35, %p36
      %p38 = scmp.ne.s32.totalorder %s27, %s28
      %p39 = scmp.eq.s32.totalorder %s19, 0
      %p40 = por %p38, %p39
      %p41 = scmp.ne.s32.totalorder %s27, %s28
      %p42 = scmp.eq.s32.totalorder %s20, 1
      %p43 = por %p41, %p42
      %p45 = scmp.ne.s32.totalorder %s28, %s44
      %p46 = scmp.eq.s32.totalorder %s20, 0
      %p47 = por %p45, %p46
      %s48 = ssub.s32 %s14, %s21
      %p49 = scmp.eq.s32.totalorder %s48, 0
      %s51 = sadd.s32 %s50, 1
      %s52 = scalar_select %p49, %s50, %s51
      %p55 = pneg %p49
      %p56 = scmp.eq.s32.totalorder %s14, 1
      %p57 = por %p55, %p56
      %p58 = scmp.ne.s32.totalorder %s50, %s53
      %p59 = scmp.eq.s32.totalorder %s14, 0
      %p60 = por %p58, %p59
      %p61 = scmp.ne.s32.totalorder %s50, %s53
      %p62 = scmp.eq.s32.totalorder %s19, 1
      %p63 = por %p61, %p62
      %p64 = scmp.ne.s32.totalorder %s53, %s54
      %p65 = scmp.eq.s32.totalorder %s19, 0
      %p66 = por %p64, %p65
      %p67 = scmp.ne.s32.totalorder %s53, %s54
      %p68 = scmp.eq.s32.totalorder %s20, 1
      %p69 = por %p67, %p68
      %p71 = scmp.ne.s32.totalorder %s54, %s70
      %p72 = scmp.eq.s32.totalorder %s20, 0
      %p73 = por %p71, %p72
      %s75 = sadd.s32 %s74, 1
      %p78 = scmp.eq.s32.totalorder %s14, 1
      %p79 = scmp.ne.s32.totalorder %s74, %s76
      %p80 = scmp.eq.s32.totalorder %s14, 0
      %p81 = por %p79, %p80
      %p82 = scmp.ne.s32.totalorder %s74, %s76
      %p83 = scmp.eq.s32.totalorder %s19, 1
      %p84 = por %p82, %p83
      %p85 = scmp.ne.s32.totalorder %s76, %s77
      %p86 = scmp.eq.s32.totalorder %s19, 0
      %p87 = por %p85, %p86
      %p88 = scmp.ne.s32.totalorder %s76, %s77
      %p89 = scmp.eq.s32.totalorder %s20, 1
      %p90 = por %p88, %p89
      %p92 = scmp.ne.s32.totalorder %s77, %s91
      %p93 = scmp.eq.s32.totalorder %s20, 0
      %p94 = por %p92, %p93
      %s96 = sadd.s32 %s95, 1
      %p99 = scmp.eq.s32.totalorder %s14, 1
      %p100 = scmp.ne.s32.totalorder %s95, %s97
      %p101 = scmp.eq.s32.totalorder %s14, 0
      %p102 = por %p100, %p101
      %p103 = scmp.ne.s32.totalorder %s95, %s97
      %p104 = scmp.eq.s32.totalorder %s19, 1
      %p105 = por %p103, %p104
      %p106 = scmp.ne.s32.totalorder %s97, %s98
      %p107 = scmp.eq.s32.totalorder %s19, 0
      %p108 = por %p106, %p107
      %p109 = scmp.ne.s32.totalorder %s97, %s98
      %p110 = scmp.eq.s32.totalorder %s20, 1
      %p111 = por %p109, %p110
      %p113 = scmp.ne.s32.totalorder %s98, %s112
      %p114 = scmp.eq.s32.totalorder %s20, 0
      %p115 = por %p113, %p114
      %s117 = sadd.s32 %s116, 1
      %p120 = scmp.eq.s32.totalorder %s14, 1
      %p121 = scmp.ne.s32.totalorder %s116, %s118
      %p122 = scmp.eq.s32.totalorder %s14, 0
      %p123 = por %p121, %p122
      %p124 = scmp.ne.s32.totalorder %s116, %s118
      %p125 = scmp.eq.s32.totalorder %s19, 1
      %p126 = por %p124, %p125
      %p127 = scmp.ne.s32.totalorder %s118, %s119
      %p128 = scmp.eq.s32.totalorder %s19, 0
      %p129 = por %p127, %p128
      %p130 = scmp.ne.s32.totalorder %s118, %s119
      %p131 = scmp.eq.s32.totalorder %s20, 1
      %p132 = por %p130, %p131
      %p134 = scmp.ne.s32.totalorder %s119, %s133
      %p135 = scmp.eq.s32.totalorder %s20, 0
      %p136 = por %p134, %p135
      %s137 = ssub.s32 %s14, %s21
      %p138 = scmp.eq.s32.totalorder %s137, 0
      %s140 = sadd.s32 %s139, 1
      %s141 = scalar_select %p138, %s139, %s140
      %p144 = pneg %p138
      %p145 = scmp.eq.s32.totalorder %s14, 1
      %p146 = por %p144, %p145
      %p147 = scmp.ne.s32.totalorder %s139, %s142
      %p148 = scmp.eq.s32.totalorder %s14, 0
      %p149 = por %p147, %p148
      %p150 = scmp.ne.s32.totalorder %s139, %s142
      %p151 = scmp.eq.s32.totalorder %s19, 1
      %p152 = por %p150, %p151
      %p153 = scmp.ne.s32.totalorder %s142, %s143
      %p154 = scmp.eq.s32.totalorder %s19, 0
      %p155 = por %p153, %p154
      %p156 = scmp.ne.s32.totalorder %s142, %s143
      %p157 = scmp.eq.s32.totalorder %s20, 1
      %p158 = por %p156, %p157
      %p160 = scmp.ne.s32.totalorder %s143, %s159
      %p161 = scmp.eq.s32.totalorder %s20, 0
      %p162 = por %p160, %p161
      %p163 = scmp.le.s32.totalorder 1, %s14
      %p164 = scmp.lt.s32.totalorder %s14, 3
      %p165 = pnand %p163, %p164
      %p166 = pneg %p165
      // Predicated region
      $region9: #{tpu_custom_call.1} parent=5 // pred_check
        _
      $region10: #{tpu_custom_call.1} parent=5 // pred_check_branch
        %168 = sbr.rel (%p165) target = $region12
      $region11: #{tpu_custom_call.1} parent=5 // pred_region
        %s169 = ssub.s32 %s14, 1
        // Predicated region
        $region13: #{tpu_custom_call.1} parent=11 // pred_check
          %p170 = pneg %p87
        $region14: #{tpu_custom_call.1} parent=11 // pred_check_branch
          %172 = sbr.rel (%p170) target = $region16
        $region15: #{tpu_custom_call.1} parent=11 // pred_region
          _
        $region16: #{tpu_custom_call.1} parent=11 // pred_fallthru
          _
        // Predicated region
        $region17: #{tpu_custom_call.1} parent=11 // pred_check
          %p173 = pneg %p108
        $region18: #{tpu_custom_call.1} parent=11 // pred_check_branch
          %175 = sbr.rel (%p173) target = $region20
        $region19: #{tpu_custom_call.1} parent=11 // pred_region
          _
        $region20: #{tpu_custom_call.1} parent=11 // pred_fallthru
          _
        // Predicated region
        $region21: #{tpu_custom_call.1} parent=11 // pred_check
          %p176 = pneg %p129
        $region22: #{tpu_custom_call.1} parent=11 // pred_check_branch
          %178 = sbr.rel (%p176) target = $region24
        $region23: #{tpu_custom_call.1} parent=11 // pred_region
          _
        $region24: #{tpu_custom_call.1} parent=11 // pred_fallthru
          _
      $region12: #{tpu_custom_call.1} parent=5 // pred_fallthru
        _
      %p179 = scmp.lt.s32.totalorder %s14, 2
      // Predicated region
      $region25: #{tpu_custom_call.1} parent=5 // pred_check
        %p180 = pneg %p179
      $region26: #{tpu_custom_call.1} parent=5 // pred_check_branch
        %182 = sbr.rel (%p180) target = $region28
      $region27: #{tpu_custom_call.1} parent=5 // pred_region
        // Predicated region
        $region29: #{tpu_custom_call.1} parent=27 // pred_check
          %p183 = pneg %p34
        $region30: #{tpu_custom_call.1} parent=27 // pred_check_branch
          %185 = sbr.rel (%p183) target = $region32
        $region31: #{tpu_custom_call.1} parent=27 // pred_region
          %s186 = smul.u32 16, %s14
          %s187 = ssub.s32 25, %s186
          %p188 = scmp.lt.s32.totalorder %s187, 16
          %s189 = scalar_select %p188, %s187, 16
          %s190 = smul.u32 128, %s189
          %p191 = scmp.lt.s32.totalorder %s186, 24
          %s192 = scalar_select %p191, %s186, 24
          %s193 = smul.addr %s192, 8
          %s194 = scalar_lea.vmem %s0, %s193
          %s195 = smul.u32 16, %s14
          %s196 = ssub.s32 25, %s195
          %p197 = scmp.lt.s32.totalorder %s196, 16
          %s198 = scalar_select %p197, %s196, 16
          %s199 = smul.u32 128, %s198
        $region32: #{tpu_custom_call.1} parent=27 // pred_fallthru
          _
        // Predicated region
        $region33: #{tpu_custom_call.1} parent=27 // pred_check
          %p200 = pneg %p60
        $region34: #{tpu_custom_call.1} parent=27 // pred_check_branch
          %202 = sbr.rel (%p200) target = $region36
        $region35: #{tpu_custom_call.1} parent=27 // pred_region
          %s203 = smul.u32 16, %s14
          %s204 = ssub.s32 25, %s203
          %p205 = scmp.lt.s32.totalorder %s204, 16
          %s206 = scalar_select %p205, %s204, 16
          %s207 = smul.u32 128, %s206
          %p208 = scmp.lt.s32.totalorder %s203, 24
          %s209 = scalar_select %p208, %s203, 24
          %s210 = smul.addr %s209, 8
          %s211 = scalar_lea.vmem %s1, %s210
          %s212 = smul.u32 16, %s14
          %s213 = ssub.s32 25, %s212
          %p214 = scmp.lt.s32.totalorder %s213, 16
          %s215 = scalar_select %p214, %s213, 16
          %s216 = smul.u32 128, %s215
        $region36: #{tpu_custom_call.1} parent=27 // pred_fallthru
          _
      $region28: #{tpu_custom_call.1} parent=5 // pred_fallthru
        _
      %p217 = scmp.le.s32.totalorder 1, %s14
      %p218 = scmp.lt.s32.totalorder %s14, 3
      %p219 = pnand %p217, %p218
      %p220 = pneg %p219
      // Predicated region
      $region37: #{tpu_custom_call.1} parent=5 // pred_check
        _
      $region38: #{tpu_custom_call.1} parent=5 // pred_check_branch
        %222 = sbr.rel (%p219) target = $region40
      $region39: #{tpu_custom_call.1} parent=5 // pred_region
        %s223 = ssub.s32 %s14, 1
        %s224 = smul.u32 16, %s19
        %s225 = ssub.s32 25, %s224
        %p226 = scmp.lt.s32.totalorder %s225, 16
        %s227 = scalar_select %p226, %s225, 16
        %s228 = smul.u32 128, %s227
        %p229 = scmp.lt.s32.totalorder %s224, 24
        %s230 = scalar_select %p229, %s224, 24
        %s231 = smul.addr %s230, 8
        %s232 = scalar_lea.vmem %s0, %s231
        %p233 = pneg %p40
        %p234 = pneg %p37
        %s235 = smul.u32 16, %s19
        %s236 = ssub.s32 25, %s235
        %p237 = scmp.lt.s32.totalorder %s236, 16
        %s238 = scalar_select %p237, %s236, 16
        %s239 = smul.u32 128, %s238
        %p240 = scmp.lt.s32.totalorder %s235, 24
        %s241 = scalar_select %p240, %s235, 24
        %s242 = smul.addr %s241, 8
        %s243 = scalar_lea.vmem %s1, %s242
        %p244 = pneg %p66
        %p245 = pneg %p63
        %p246 = pneg %p87
        %p247 = pneg %p84
        %p248 = pneg %p108
        %p249 = pneg %p105
        %p250 = pneg %p129
        %p251 = pneg %p126
        %p252 = pneg %p155
        %p253 = pneg %p152
        %s254 = sand.u32 %s142, 1
        %s255 = scalar_lea.sflag [#allocation3], %s254
        %s256 = sand.u32 %s142, 1
        %s257 = smul.addr %s256, 32
        %s258 = scalar_lea.vmem [#allocation2], %s257
        %s259 = smul.u32 16, %s19
        %s260 = ssub.s32 25, %s259
        %p261 = scmp.lt.s32.totalorder %s260, 16
        %s262 = scalar_select %p261, %s260, 16
        %s263 = smul.u32 128, %s262
        %p264 = scmp.lt.s32.totalorder %s259, 24
        %s265 = scalar_select %p264, %s259, 24
        %s266 = smul.addr %s265, 8
        %s267 = scalar_lea.vmem %s0, %s266
        %s268 = smul.u32 16, %s19
        %s269 = ssub.s32 25, %s268
        %p270 = scmp.lt.s32.totalorder %s269, 16
        %s271 = scalar_select %p270, %s269, 16
        %s272 = smul.u32 128, %s271
        %s273 = smul.u32 16, %s19
        %s274 = ssub.s32 25, %s273
        %p275 = scmp.lt.s32.totalorder %s274, 16
        %s276 = scalar_select %p275, %s274, 16
        %s277 = smul.u32 128, %s276
        %p278 = scmp.lt.s32.totalorder %s273, 24
        %s279 = scalar_select %p278, %s273, 24
        %s280 = smul.addr %s279, 8
        %s281 = scalar_lea.vmem %s1, %s280
        %s282 = smul.u32 16, %s19
        %s283 = ssub.s32 25, %s282
        %p284 = scmp.lt.s32.totalorder %s283, 16
        %s285 = scalar_select %p284, %s283, 16
        %s286 = smul.u32 128, %s285
        %s287 = smul.u32 4, %s19
        %s288 = ssub.s32 7, %s287
        %p289 = scmp.lt.s32.totalorder %s288, 4
        %s290 = scalar_select %p289, %s288, 4
        %s291 = smul.u32 128, %s290
        %s292 = smul.u32 %s19, 128
        %v293 = vlaneseq
        %v294 = vshrl.u32 %v293, 7
        %v295 = vadd.s32 %v294, 8
        %v296 = vadd.s32 %v294, 16
        %v297 = vadd.s32 %v294, 24
        %v298 = vmul.u32 %v294, 4
        %v299 = vmul.u32 %v295, 4
        %v300 = vmul.u32 %v296, 4
        %v301 = vmul.u32 %v297, 4
        %v302 = vld [vmem:[%s267] ss:$4 sm:$0xff]
        %s303 = scalar_lea.vmem %s267, 32
        %v304 = vld [vmem:[%s303] ss:$4 sm:$0xff]
        %s305 = scalar_lea.vmem %s267, 64
        %v306 = vld [vmem:[%s305] ss:$4 sm:$0xff]
        %s307 = scalar_lea.vmem %s267, 96
        %v308 = vld [vmem:[%s307] ss:$4 sm:$0xff]
        %v309 = vld [vmem:[%s281] ss:$4 sm:$0xff]
        %s310 = scalar_lea.vmem %s281, 32
        %v311 = vld [vmem:[%s310] ss:$4 sm:$0xff]
        %s312 = scalar_lea.vmem %s281, 64
        %v313 = vld [vmem:[%s312] ss:$4 sm:$0xff]
        %s314 = scalar_lea.vmem %s281, 96
        %v315 = vld [vmem:[%s314] ss:$4 sm:$0xff]
        %v316 = vstv %s292
        %v317 = vadd.s32 %v316, %v298
        %v318 = vadd.s32 %v316, %v299
        %v319 = vadd.s32 %v316, %v300
        %v320 = vadd.s32 %v316, %v301
        %vm321 = vcmp.lt.s32.totalorder %v317, 200
        %vm322 = vcmp.lt.s32.totalorder %v318, 200
        %vm323 = vcmp.lt.s32.totalorder %v319, 200
        %vm324 = vcmp.lt.s32.totalorder %v320, 200
        %v325 = vsel %vm321, 1, 0
        %v326 = vsel %vm322, 1, 0
        %v327 = vsel %vm323, 1, 0
        %v328 = vsel %vm324, 1, 0
        %vm329 = vcmp.eq.s32.totalorder %v325, 1
        %vm330 = vcmp.eq.s32.totalorder %v326, 1
        %vm331 = vcmp.eq.s32.totalorder %v327, 1
        %vm332 = vcmp.eq.s32.totalorder %v328, 1
        %v333 = vsel %vm329, %v302, 0.0
        %v334 = vsel %vm330, %v304, 0.0
        %v335 = vsel %vm331, %v306, 0.0
        %v336 = vsel %vm332, %v308, 0.0
        %v337 = vsel %vm329, %v309, 0.0
        %v338 = vsel %vm330, %v311, 0.0
        %v339 = vsel %vm331, %v313, 0.0
        %v340 = vsel %vm332, %v315, 0.0
        %v341 = vld [vmem:[%s2] sm:$0xff]
        %v342 = vld [vmem:[%s2 + $0x8] sm:$0xff]
        %v343 = vld [vmem:[%s3] sm:$0xff]
        %v344 = vld [vmem:[%s3 + $0x8] sm:$0xff]
        %v345 = vld [vmem:[%s3 + $0x10] sm:$0xf]
        %vm346 = vcmask 162816
        %v348 = vsel %vm346, %v337, 0
        %v351 = vsel %vm346, %v338, 0
        %v354 = vsel %vm346, %v339, 0
        %v357 = vsel %vm346, %v340, 0
        %vm359 = vcmask 1043456
        %v361 = vsel %vm359, %v345, 0
        %363 = vmatprep.subr.mxu0 0.0
        %364 = vmatpush1.msra.mxu0 0.0
        %365 = vmatprep.subr.mxu0 0.0
        %366 = vmatpush1.msra.mxu0 0.0
        %367 = vmatprep.subr.mxu0 0.0
        %368 = vmatpush1.msra.mxu0 0.0
        %369 = vmatprep.subr.mxu0 0.0
        %370 = vmatpush1.msra.mxu0 0.0
        %371 = vmatprep.subr.mxu0 0.0
        %372 = vmatpush1.msra.mxu0 0.0
        %373 = vmatprep.subr.mxu0 0.0
        %374 = vmatpush1.msra.mxu0 0.0
        %375 = vmatprep.subr.mxu0 0.0
        %376 = vmatpush1.msra.mxu0 0.0
        %377 = vmatprep.subr.mxu0 0.0
        %378 = vmatpush1.msra.mxu0 0.0
        %379 = vmatprep.subr.mxu0 0.0
        %380 = vmatpush1.msra.mxu0 0.0
        %381 = vmatprep.subr.mxu0 0.0
        %382 = vmatpush1.msra.mxu0 0.0
        %383 = vmatprep.subr.mxu0 0.0
        %384 = vmatpush1.msra.mxu0 0.0
        %385 = vmatprep.subr.mxu0 0.0
        %386 = vmatpush1.msra.mxu0 0.0
        %387 = vmatprep.subr.mxu0 0.0
        %388 = vmatpush1.msra.mxu0 0.0
        %389 = vmatprep.subr.mxu0 0.0
        %390 = vmatpush1.msra.mxu0 %v361
        %391 = vmatprep.subr.mxu0 0.0
        %392 = vmatpush1.msra.mxu0 %v344
        %393 = vmatprep.subr.mxu0 0.0
        %394 = vmatpush1.msra.mxu0 %v343
        %395 = vmatprep.subr.mxu0 0.0
        %396 = vmatpush2.msra.mxu0 0.0
        %397 = vmatprep.subr.mxu0 0.0
        %398 = vmatpush2.msra.mxu0 0.0
        %399 = vmatprep.subr.mxu0 0.0
        %400 = vmatpush2.msra.mxu0 0.0
        %401 = vmatprep.subr.mxu0 0.0
        %402 = vmatpush2.msra.mxu0 0.0
        %403 = vmatprep.subr.mxu0 0.0
        %404 = vmatpush2.msra.mxu0 0.0
        %405 = vmatprep.subr.mxu0 0.0
        %406 = vmatpush2.msra.mxu0 0.0
        %407 = vmatprep.subr.mxu0 0.0
        %408 = vmatpush2.msra.mxu0 0.0
        %409 = vmatprep.subr.mxu0 0.0
        %410 = vmatpush2.msra.mxu0 0.0
        %411 = vmatprep.subr.mxu0 0.0
        %412 = vmatpush2.msra.mxu0 0.0
        %413 = vmatprep.subr.mxu0 0.0
        %414 = vmatpush2.msra.mxu0 0.0
        %415 = vmatprep.subr.mxu0 0.0
        %416 = vmatpush2.msra.mxu0 0.0
        %417 = vmatprep.subr.mxu0 0.0
        %418 = vmatpush2.msra.mxu0 0.0
        %419 = vmatprep.subr.mxu0 0.0
        %420 = vmatpush2.msra.mxu0 0.0
        %421 = vmatprep.subr.mxu0 0.0
        %422 = vmatpush2.msra.mxu0 0.0
        %423 = vmatprep.subr.mxu0 0.0
        %424 = vmatpush2.msra.mxu0 0.0
        %425 = vmatprep.subr.mxu0 0.0
        %426 = vmatpush2.msra.mxu0 0.0
        %427 = vmatprep.mubr.f32.mxu0 0.0
        %428 = vmatmul.mubr.f32.gmra.mxu0 %v348
        %v429 = vpop.f32.mrf.mxu0
        %v430 = vadd.f32 0.0, %v429
        %v431 = vpop.f32.mrf.mxu0
        %432 = vmatprep.mubr.f32.mxu0 0.0
        %433 = vmatmul.mubr.f32.gmra.mxu0 %v351
        %v434 = vpop.f32.mrf.mxu0
        %v435 = vadd.f32 0.0, %v434
        %v436 = vpop.f32.mrf.mxu0
        %437 = vmatprep.mubr.f32.mxu0 0.0
        %438 = vmatmul.mubr.f32.gmra.mxu0 %v354
        %v439 = vpop.f32.mrf.mxu0
        %v440 = vadd.f32 0.0, %v439
        %v441 = vpop.f32.mrf.mxu0
        %442 = vmatprep.mubr.f32.mxu0 0.0
        %443 = vmatmul.mubr.f32.gmra.mxu0 %v357
        %v444 = vpop.f32.mrf.mxu0
        %v445 = vadd.f32 0.0, %v444
        %v446 = vpop.f32.mrf.mxu0
        %447 = vdwg.mxu0
        %vm448 = vcmask 130048
        %v450 = vsel %vm448, %v333, 0
        %v453 = vsel %vm448, %v334, 0
        %v456 = vsel %vm448, %v335, 0
        %v459 = vsel %vm448, %v336, 0
        %461 = vmatprep.subr.mxu0 0.0
        %462 = vmatpush1.msra.mxu0 0.0
        %463 = vmatprep.subr.mxu0 0.0
        %464 = vmatpush1.msra.mxu0 0.0
        %465 = vmatprep.subr.mxu0 0.0
        %466 = vmatpush1.msra.mxu0 0.0
        %467 = vmatprep.subr.mxu0 0.0
        %468 = vmatpush1.msra.mxu0 0.0
        %469 = vmatprep.subr.mxu0 0.0
        %470 = vmatpush1.msra.mxu0 0.0
        %471 = vmatprep.subr.mxu0 0.0
        %472 = vmatpush1.msra.mxu0 0.0
        %473 = vmatprep.subr.mxu0 0.0
        %474 = vmatpush1.msra.mxu0 0.0
        %475 = vmatprep.subr.mxu0 0.0
        %476 = vmatpush1.msra.mxu0 0.0
        %477 = vmatprep.subr.mxu0 0.0
        %478 = vmatpush1.msra.mxu0 0.0
        %479 = vmatprep.subr.mxu0 0.0
        %480 = vmatpush1.msra.mxu0 0.0
        %481 = vmatprep.subr.mxu0 0.0
        %482 = vmatpush1.msra.mxu0 0.0
        %483 = vmatprep.subr.mxu0 0.0
        %484 = vmatpush1.msra.mxu0 0.0
        %485 = vmatprep.subr.mxu0 0.0
        %486 = vmatpush1.msra.mxu0 0.0
        %487 = vmatprep.subr.mxu0 0.0
        %488 = vmatpush1.msra.mxu0 0.0
        %489 = vmatprep.subr.mxu0 0.0
        %490 = vmatpush1.msra.mxu0 %v342
        %491 = vmatprep.subr.mxu0 0.0
        %492 = vmatpush1.msra.mxu0 %v341
        %493 = vmatprep.subr.mxu0 0.0
        %494 = vmatpush2.msra.mxu0 0.0
        %495 = vmatprep.subr.mxu0 0.0
        %496 = vmatpush2.msra.mxu0 0.0
        %497 = vmatprep.subr.mxu0 0.0
        %498 = vmatpush2.msra.mxu0 0.0
        %499 = vmatprep.subr.mxu0 0.0
        %500 = vmatpush2.msra.mxu0 0.0
        %501 = vmatprep.subr.mxu0 0.0
        %502 = vmatpush2.msra.mxu0 0.0
        %503 = vmatprep.subr.mxu0 0.0
        %504 = vmatpush2.msra.mxu0 0.0
        %505 = vmatprep.subr.mxu0 0.0
        %506 = vmatpush2.msra.mxu0 0.0
        %507 = vmatprep.subr.mxu0 0.0
        %508 = vmatpush2.msra.mxu0 0.0
        %509 = vmatprep.subr.mxu0 0.0
        %510 = vmatpush2.msra.mxu0 0.0
        %511 = vmatprep.subr.mxu0 0.0
        %512 = vmatpush2.msra.mxu0 0.0
        %513 = vmatprep.subr.mxu0 0.0
        %514 = vmatpush2.msra.mxu0 0.0
        %515 = vmatprep.subr.mxu0 0.0
        %516 = vmatpush2.msra.mxu0 0.0
        %517 = vmatprep.subr.mxu0 0.0
        %518 = vmatpush2.msra.mxu0 0.0
        %519 = vmatprep.subr.mxu0 0.0
        %520 = vmatpush2.msra.mxu0 0.0
        %521 = vmatprep.subr.mxu0 0.0
        %522 = vmatpush2.msra.mxu0 0.0
        %523 = vmatprep.subr.mxu0 0.0
        %524 = vmatpush2.msra.mxu0 0.0
        %525 = vmatprep.mubr.f32.mxu0 0.0
        %526 = vmatmul.mubr.f32.gmra.mxu0 %v450
        %v527 = vpop.f32.mrf.mxu0
        %v528 = vadd.f32 %v430, %v527
        %v529 = vpop.f32.mrf.mxu0
        %530 = vmatprep.mubr.f32.mxu0 0.0
        %531 = vmatmul.mubr.f32.gmra.mxu0 %v453
        %v532 = vpop.f32.mrf.mxu0
        %v533 = vadd.f32 %v435, %v532
        %v534 = vpop.f32.mrf.mxu0
        %535 = vmatprep.mubr.f32.mxu0 0.0
        %536 = vmatmul.mubr.f32.gmra.mxu0 %v456
        %v537 = vpop.f32.mrf.mxu0
        %v538 = vadd.f32 %v440, %v537
        %v539 = vpop.f32.mrf.mxu0
        %540 = vmatprep.mubr.f32.mxu0 0.0
        %541 = vmatmul.mubr.f32.gmra.mxu0 %v459
        %v542 = vpop.f32.mrf.mxu0
        %v543 = vadd.f32 %v445, %v542
        %v544 = vpop.f32.mrf.mxu0
        %545 = vdwg.mxu0
        %s546 = scalar_lea.vmem %s267, 1
        %v547 = vld [vmem:[%s546] ss:$4 sm:$0xff]
        %s548 = scalar_lea.vmem %s267, 33
        %v549 = vld [vmem:[%s548] ss:$4 sm:$0xff]
        %s550 = scalar_lea.vmem %s267, 65
        %v551 = vld [vmem:[%s550] ss:$4 sm:$0xff]
        %s552 = scalar_lea.vmem %s267, 97
        %v553 = vld [vmem:[%s552] ss:$4 sm:$0xff]
        %s554 = scalar_lea.vmem %s281, 1
        %v555 = vld [vmem:[%s554] ss:$4 sm:$0xff]
        %s556 = scalar_lea.vmem %s281, 33
        %v557 = vld [vmem:[%s556] ss:$4 sm:$0xff]
        %s558 = scalar_lea.vmem %s281, 65
        %v559 = vld [vmem:[%s558] ss:$4 sm:$0xff]
        %s560 = scalar_lea.vmem %s281, 97
        %v561 = vld [vmem:[%s560] ss:$4 sm:$0xff]
        %v562 = vadd.s32 %v317, 1
        %v563 = vadd.s32 %v318, 1
        %v564 = vadd.s32 %v319, 1
        %v565 = vadd.s32 %v320, 1
        %vm566 = vcmp.lt.s32.totalorder %v562, 200
        %vm567 = vcmp.lt.s32.totalorder %v563, 200
        %vm568 = vcmp.lt.s32.totalorder %v564, 200
        %vm569 = vcmp.lt.s32.totalorder %v565, 200
        %v570 = vsel %vm566, 1, 0
        %v571 = vsel %vm567, 1, 0
        %v572 = vsel %vm568, 1, 0
        %v573 = vsel %vm569, 1, 0
        %vm574 = vcmp.eq.s32.totalorder %v570, 1
        %vm575 = vcmp.eq.s32.totalorder %v571, 1
        %vm576 = vcmp.eq.s32.totalorder %v572, 1
        %vm577 = vcmp.eq.s32.totalorder %v573, 1
        %v578 = vsel %vm574, %v547, 0.0
        %v579 = vsel %vm575, %v549, 0.0
        %v580 = vsel %vm576, %v551, 0.0
        %v581 = vsel %vm577, %v553, 0.0
        %v582 = vsel %vm574, %v555, 0.0
        %v583 = vsel %vm575, %v557, 0.0
        %v584 = vsel %vm576, %v559, 0.0
        %v585 = vsel %vm577, %v561, 0.0
        %s586 = scalar_lea.vmem %s2, 16
        %v587 = vld [vmem:[%s586] sm:$0xff]
        %v588 = vld [vmem:[%s586 + $0x8] sm:$0xff]
        %v590 = vsel %vm448, %v578, 0
        %v593 = vsel %vm448, %v579, 0
        %v596 = vsel %vm448, %v580, 0
        %v599 = vsel %vm448, %v581, 0
        %601 = vmatprep.subr.mxu0 0.0
        %602 = vmatpush1.msra.mxu0 0.0
        %603 = vmatprep.subr.mxu0 0.0
        %604 = vmatpush1.msra.mxu0 0.0
        %605 = vmatprep.subr.mxu0 0.0
        %606 = vmatpush1.msra.mxu0 0.0
        %607 = vmatprep.subr.mxu0 0.0
        %608 = vmatpush1.msra.mxu0 0.0
        %609 = vmatprep.subr.mxu0 0.0
        %610 = vmatpush1.msra.mxu0 0.0
        %611 = vmatprep.subr.mxu0 0.0
        %612 = vmatpush1.msra.mxu0 0.0
        %613 = vmatprep.subr.mxu0 0.0
        %614 = vmatpush1.msra.mxu0 0.0
        %615 = vmatprep.subr.mxu0 0.0
        %616 = vmatpush1.msra.mxu0 0.0
        %617 = vmatprep.subr.mxu0 0.0
        %618 = vmatpush1.msra.mxu0 0.0
        %619 = vmatprep.subr.mxu0 0.0
        %620 = vmatpush1.msra.mxu0 0.0
        %621 = vmatprep.subr.mxu0 0.0
        %622 = vmatpush1.msra.mxu0 0.0
        %623 = vmatprep.subr.mxu0 0.0
        %624 = vmatpush1.msra.mxu0 0.0
        %625 = vmatprep.subr.mxu0 0.0
        %626 = vmatpush1.msra.mxu0 0.0
        %627 = vmatprep.subr.mxu0 0.0
        %628 = vmatpush1.msra.mxu0 0.0
        %629 = vmatprep.subr.mxu0 0.0
        %630 = vmatpush1.msra.mxu0 %v588
        %631 = vmatprep.subr.mxu0 0.0
        %632 = vmatpush1.msra.mxu0 %v587
        %633 = vmatprep.subr.mxu0 0.0
        %634 = vmatpush2.msra.mxu0 0.0
        %635 = vmatprep.subr.mxu0 0.0
        %636 = vmatpush2.msra.mxu0 0.0
        %637 = vmatprep.subr.mxu0 0.0
        %638 = vmatpush2.msra.mxu0 0.0
        %639 = vmatprep.subr.mxu0 0.0
        %640 = vmatpush2.msra.mxu0 0.0
        %641 = vmatprep.subr.mxu0 0.0
        %642 = vmatpush2.msra.mxu0 0.0
        %643 = vmatprep.subr.mxu0 0.0
        %644 = vmatpush2.msra.mxu0 0.0
        %645 = vmatprep.subr.mxu0 0.0
        %646 = vmatpush2.msra.mxu0 0.0
        %647 = vmatprep.subr.mxu0 0.0
        %648 = vmatpush2.msra.mxu0 0.0
        %649 = vmatprep.subr.mxu0 0.0
        %650 = vmatpush2.msra.mxu0 0.0
        %651 = vmatprep.subr.mxu0 0.0
        %652 = vmatpush2.msra.mxu0 0.0
        %653 = vmatprep.subr.mxu0 0.0
        %654 = vmatpush2.msra.mxu0 0.0
        %655 = vmatprep.subr.mxu0 0.0
        %656 = vmatpush2.msra.mxu0 0.0
        %657 = vmatprep.subr.mxu0 0.0
        %658 = vmatpush2.msra.mxu0 0.0
        %659 = vmatprep.subr.mxu0 0.0
        %660 = vmatpush2.msra.mxu0 0.0
        %661 = vmatprep.subr.mxu0 0.0
        %662 = vmatpush2.msra.mxu0 0.0
        %663 = vmatprep.subr.mxu0 0.0
        %664 = vmatpush2.msra.mxu0 0.0
        %665 = vmatprep.mubr.f32.mxu0 0.0
        %666 = vmatmul.mubr.f32.gmra.mxu0 %v590
        %v667 = vpop.f32.mrf.mxu0
        %v668 = vadd.f32 0.0, %v667
        %v669 = vpop.f32.mrf.mxu0
        %670 = vmatprep.mubr.f32.mxu0 0.0
        %671 = vmatmul.mubr.f32.gmra.mxu0 %v593
        %v672 = vpop.f32.mrf.mxu0
        %v673 = vadd.f32 0.0, %v672
        %v674 = vpop.f32.mrf.mxu0
        %675 = vmatprep.mubr.f32.mxu0 0.0
        %676 = vmatmul.mubr.f32.gmra.mxu0 %v596
        %v677 = vpop.f32.mrf.mxu0
        %v678 = vadd.f32 0.0, %v677
        %v679 = vpop.f32.mrf.mxu0
        %680 = vmatprep.mubr.f32.mxu0 0.0
        %681 = vmatmul.mubr.f32.gmra.mxu0 %v599
        %v682 = vpop.f32.mrf.mxu0
        %v683 = vadd.f32 0.0, %v682
        %v684 = vpop.f32.mrf.mxu0
        %685 = vdwg.mxu0
        %v686 = vadd.f32 %v528, %v668
        %v687 = vadd.f32 %v533, %v673
        %v688 = vadd.f32 %v538, %v678
        %v689 = vadd.f32 %v543, %v683
        %s690 = scalar_lea.vmem %s3, 24
        %v691 = vld [vmem:[%s690] sm:$0xff]
        %v692 = vld [vmem:[%s690 + $0x8] sm:$0xff]
        %v693 = vld [vmem:[%s690 + $0x10] sm:$0xf]
        %v695 = vsel %vm346, %v582, 0
        %v698 = vsel %vm346, %v583, 0
        %v701 = vsel %vm346, %v584, 0
        %v704 = vsel %vm346, %v585, 0
        %v707 = vsel %vm359, %v693, 0
        %709 = vmatprep.subr.mxu0 0.0
        %710 = vmatpush1.msra.mxu0 0.0
        %711 = vmatprep.subr.mxu0 0.0
        %712 = vmatpush1.msra.mxu0 0.0
        %713 = vmatprep.subr.mxu0 0.0
        %714 = vmatpush1.msra.mxu0 0.0
        %715 = vmatprep.subr.mxu0 0.0
        %716 = vmatpush1.msra.mxu0 0.0
        %717 = vmatprep.subr.mxu0 0.0
        %718 = vmatpush1.msra.mxu0 0.0
        %719 = vmatprep.subr.mxu0 0.0
        %720 = vmatpush1.msra.mxu0 0.0
        %721 = vmatprep.subr.mxu0 0.0
        %722 = vmatpush1.msra.mxu0 0.0
        %723 = vmatprep.subr.mxu0 0.0
        %724 = vmatpush1.msra.mxu0 0.0
        %725 = vmatprep.subr.mxu0 0.0
        %726 = vmatpush1.msra.mxu0 0.0
        %727 = vmatprep.subr.mxu0 0.0
        %728 = vmatpush1.msra.mxu0 0.0
        %729 = vmatprep.subr.mxu0 0.0
        %730 = vmatpush1.msra.mxu0 0.0
        %731 = vmatprep.subr.mxu0 0.0
        %732 = vmatpush1.msra.mxu0 0.0
        %733 = vmatprep.subr.mxu0 0.0
        %734 = vmatpush1.msra.mxu0 0.0
        %735 = vmatprep.subr.mxu0 0.0
        %736 = vmatpush1.msra.mxu0 %v707
        %737 = vmatprep.subr.mxu0 0.0
        %738 = vmatpush1.msra.mxu0 %v692
        %739 = vmatprep.subr.mxu0 0.0
        %740 = vmatpush1.msra.mxu0 %v691
        %741 = vmatprep.subr.mxu0 0.0
        %742 = vmatpush2.msra.mxu0 0.0
        %743 = vmatprep.subr.mxu0 0.0
        %744 = vmatpush2.msra.mxu0 0.0
        %745 = vmatprep.subr.mxu0 0.0
        %746 = vmatpush2.msra.mxu0 0.0
        %747 = vmatprep.subr.mxu0 0.0
        %748 = vmatpush2.msra.mxu0 0.0
        %749 = vmatprep.subr.mxu0 0.0
        %750 = vmatpush2.msra.mxu0 0.0
        %751 = vmatprep.subr.mxu0 0.0
        %752 = vmatpush2.msra.mxu0 0.0
        %753 = vmatprep.subr.mxu0 0.0
        %754 = vmatpush2.msra.mxu0 0.0
        %755 = vmatprep.subr.mxu0 0.0
        %756 = vmatpush2.msra.mxu0 0.0
        %757 = vmatprep.subr.mxu0 0.0
        %758 = vmatpush2.msra.mxu0 0.0
        %759 = vmatprep.subr.mxu0 0.0
        %760 = vmatpush2.msra.mxu0 0.0
        %761 = vmatprep.subr.mxu0 0.0
        %762 = vmatpush2.msra.mxu0 0.0
        %763 = vmatprep.subr.mxu0 0.0
        %764 = vmatpush2.msra.mxu0 0.0
        %765 = vmatprep.subr.mxu0 0.0
        %766 = vmatpush2.msra.mxu0 0.0
        %767 = vmatprep.subr.mxu0 0.0
        %768 = vmatpush2.msra.mxu0 0.0
        %769 = vmatprep.subr.mxu0 0.0
        %770 = vmatpush2.msra.mxu0 0.0
        %771 = vmatprep.subr.mxu0 0.0
        %772 = vmatpush2.msra.mxu0 0.0
        %773 = vmatprep.mubr.f32.mxu0 0.0
        %774 = vmatmul.mubr.f32.gmra.mxu0 %v695
        %v775 = vpop.f32.mrf.mxu0
        %v776 = vadd.f32 0.0, %v775
        %v777 = vpop.f32.mrf.mxu0
        %778 = vmatprep.mubr.f32.mxu0 0.0
        %779 = vmatmul.mubr.f32.gmra.mxu0 %v698
        %v780 = vpop.f32.mrf.mxu0
        %v781 = vadd.f32 0.0, %v780
        %v782 = vpop.f32.mrf.mxu0
        %783 = vmatprep.mubr.f32.mxu0 0.0
        %784 = vmatmul.mubr.f32.gmra.mxu0 %v701
        %v785 = vpop.f32.mrf.mxu0
        %v786 = vadd.f32 0.0, %v785
        %v787 = vpop.f32.mrf.mxu0
        %788 = vmatprep.mubr.f32.mxu0 0.0
        %789 = vmatmul.mubr.f32.gmra.mxu0 %v704
        %v790 = vpop.f32.mrf.mxu0
        %v791 = vadd.f32 0.0, %v790
        %v792 = vpop.f32.mrf.mxu0
        %793 = vdwg.mxu0
        %v794 = vadd.f32 %v686, %v776
        %v795 = vadd.f32 %v687, %v781
        %v796 = vadd.f32 %v688, %v786
        %v797 = vadd.f32 %v689, %v791
        %s798 = scalar_lea.vmem %s267, 2
        %v799 = vld [vmem:[%s798] ss:$4 sm:$0xff]
        %s800 = scalar_lea.vmem %s267, 34
        %v801 = vld [vmem:[%s800] ss:$4 sm:$0xff]
        %s802 = scalar_lea.vmem %s267, 66
        %v803 = vld [vmem:[%s802] ss:$4 sm:$0xff]
        %s804 = scalar_lea.vmem %s267, 98
        %v805 = vld [vmem:[%s804] ss:$4 sm:$0xff]
        %s806 = scalar_lea.vmem %s281, 2
        %v807 = vld [vmem:[%s806] ss:$4 sm:$0xff]
        %s808 = scalar_lea.vmem %s281, 34
        %v809 = vld [vmem:[%s808] ss:$4 sm:$0xff]
        %s810 = scalar_lea.vmem %s281, 66
        %v811 = vld [vmem:[%s810] ss:$4 sm:$0xff]
        %s812 = scalar_lea.vmem %s281, 98
        %v813 = vld [vmem:[%s812] ss:$4 sm:$0xff]
        %v814 = vadd.s32 %v317, 2
        %v815 = vadd.s32 %v318, 2
        %v816 = vadd.s32 %v319, 2
        %v817 = vadd.s32 %v320, 2
        %vm818 = vcmp.lt.s32.totalorder %v814, 200
        %vm819 = vcmp.lt.s32.totalorder %v815, 200
        %vm820 = vcmp.lt.s32.totalorder %v816, 200
        %vm821 = vcmp.lt.s32.totalorder %v817, 200
        %v822 = vsel %vm818, 1, 0
        %v823 = vsel %vm819, 1, 0
        %v824 = vsel %vm820, 1, 0
        %v825 = vsel %vm821, 1, 0
        %vm826 = vcmp.eq.s32.totalorder %v822, 1
        %vm827 = vcmp.eq.s32.totalorder %v823, 1
        %vm828 = vcmp.eq.s32.totalorder %v824, 1
        %vm829 = vcmp.eq.s32.totalorder %v825, 1
        %v830 = vsel %vm826, %v799, 0.0
        %v831 = vsel %vm827, %v801, 0.0
        %v832 = vsel %vm828, %v803, 0.0
        %v833 = vsel %vm829, %v805, 0.0
        %v834 = vsel %vm826, %v807, 0.0
        %v835 = vsel %vm827, %v809, 0.0
        %v836 = vsel %vm828, %v811, 0.0
        %v837 = vsel %vm829, %v813, 0.0
        %s838 = scalar_lea.vmem %s2, 32
        %v839 = vld [vmem:[%s838] sm:$0xff]
        %v840 = vld [vmem:[%s838 + $0x8] sm:$0xff]
        %v842 = vsel %vm448, %v830, 0
        %v845 = vsel %vm448, %v831, 0
        %v848 = vsel %vm448, %v832, 0
        %v851 = vsel %vm448, %v833, 0
        %853 = vmatprep.subr.mxu0 0.0
        %854 = vmatpush1.msra.mxu0 0.0
        %855 = vmatprep.subr.mxu0 0.0
        %856 = vmatpush1.msra.mxu0 0.0
        %857 = vmatprep.subr.mxu0 0.0
        %858 = vmatpush1.msra.mxu0 0.0
        %859 = vmatprep.subr.mxu0 0.0
        %860 = vmatpush1.msra.mxu0 0.0
        %861 = vmatprep.subr.mxu0 0.0
        %862 = vmatpush1.msra.mxu0 0.0
        %863 = vmatprep.subr.mxu0 0.0
        %864 = vmatpush1.msra.mxu0 0.0
        %865 = vmatprep.subr.mxu0 0.0
        %866 = vmatpush1.msra.mxu0 0.0
        %867 = vmatprep.subr.mxu0 0.0
        %868 = vmatpush1.msra.mxu0 0.0
        %869 = vmatprep.subr.mxu0 0.0
        %870 = vmatpush1.msra.mxu0 0.0
        %871 = vmatprep.subr.mxu0 0.0
        %872 = vmatpush1.msra.mxu0 0.0
        %873 = vmatprep.subr.mxu0 0.0
        %874 = vmatpush1.msra.mxu0 0.0
        %875 = vmatprep.subr.mxu0 0.0
        %876 = vmatpush1.msra.mxu0 0.0
        %877 = vmatprep.subr.mxu0 0.0
        %878 = vmatpush1.msra.mxu0 0.0
        %879 = vmatprep.subr.mxu0 0.0
        %880 = vmatpush1.msra.mxu0 0.0
        %881 = vmatprep.subr.mxu0 0.0
        %882 = vmatpush1.msra.mxu0 %v840
        %883 = vmatprep.subr.mxu0 0.0
        %884 = vmatpush1.msra.mxu0 %v839
        %885 = vmatprep.subr.mxu0 0.0
        %886 = vmatpush2.msra.mxu0 0.0
        %887 = vmatprep.subr.mxu0 0.0
        %888 = vmatpush2.msra.mxu0 0.0
        %889 = vmatprep.subr.mxu0 0.0
        %890 = vmatpush2.msra.mxu0 0.0
        %891 = vmatprep.subr.mxu0 0.0
        %892 = vmatpush2.msra.mxu0 0.0
        %893 = vmatprep.subr.mxu0 0.0
        %894 = vmatpush2.msra.mxu0 0.0
        %895 = vmatprep.subr.mxu0 0.0
        %896 = vmatpush2.msra.mxu0 0.0
        %897 = vmatprep.subr.mxu0 0.0
        %898 = vmatpush2.msra.mxu0 0.0
        %899 = vmatprep.subr.mxu0 0.0
        %900 = vmatpush2.msra.mxu0 0.0
        %901 = vmatprep.subr.mxu0 0.0
        %902 = vmatpush2.msra.mxu0 0.0
        %903 = vmatprep.subr.mxu0 0.0
        %904 = vmatpush2.msra.mxu0 0.0
        %905 = vmatprep.subr.mxu0 0.0
        %906 = vmatpush2.msra.mxu0 0.0
        %907 = vmatprep.subr.mxu0 0.0
        %908 = vmatpush2.msra.mxu0 0.0
        %909 = vmatprep.subr.mxu0 0.0
        %910 = vmatpush2.msra.mxu0 0.0
        %911 = vmatprep.subr.mxu0 0.0
        %912 = vmatpush2.msra.mxu0 0.0
        %913 = vmatprep.subr.mxu0 0.0
        %914 = vmatpush2.msra.mxu0 0.0
        %915 = vmatprep.subr.mxu0 0.0
        %916 = vmatpush2.msra.mxu0 0.0
        %917 = vmatprep.mubr.f32.mxu0 0.0
        %918 = vmatmul.mubr.f32.gmra.mxu0 %v842
        %v919 = vpop.f32.mrf.mxu0
        %v920 = vadd.f32 0.0, %v919
        %v921 = vpop.f32.mrf.mxu0
        %922 = vmatprep.mubr.f32.mxu0 0.0
        %923 = vmatmul.mubr.f32.gmra.mxu0 %v845
        %v924 = vpop.f32.mrf.mxu0
        %v925 = vadd.f32 0.0, %v924
        %v926 = vpop.f32.mrf.mxu0
        %927 = vmatprep.mubr.f32.mxu0 0.0
        %928 = vmatmul.mubr.f32.gmra.mxu0 %v848
        %v929 = vpop.f32.mrf.mxu0
        %v930 = vadd.f32 0.0, %v929
        %v931 = vpop.f32.mrf.mxu0
        %932 = vmatprep.mubr.f32.mxu0 0.0
        %933 = vmatmul.mubr.f32.gmra.mxu0 %v851
        %v934 = vpop.f32.mrf.mxu0
        %v935 = vadd.f32 0.0, %v934
        %v936 = vpop.f32.mrf.mxu0
        %937 = vdwg.mxu0
        %v938 = vadd.f32 %v794, %v920
        %v939 = vadd.f32 %v795, %v925
        %v940 = vadd.f32 %v796, %v930
        %v941 = vadd.f32 %v797, %v935
        %s942 = scalar_lea.vmem %s3, 48
        %v943 = vld [vmem:[%s942] sm:$0xff]
        %v944 = vld [vmem:[%s942 + $0x8] sm:$0xff]
        %v945 = vld [vmem:[%s942 + $0x10] sm:$0xf]
        %v947 = vsel %vm346, %v834, 0
        %v950 = vsel %vm346, %v835, 0
        %v953 = vsel %vm346, %v836, 0
        %v956 = vsel %vm346, %v837, 0
        %v959 = vsel %vm359, %v945, 0
        %961 = vmatprep.subr.mxu0 0.0
        %962 = vmatpush1.msra.mxu0 0.0
        %963 = vmatprep.subr.mxu0 0.0
        %964 = vmatpush1.msra.mxu0 0.0
        %965 = vmatprep.subr.mxu0 0.0
        %966 = vmatpush1.msra.mxu0 0.0
        %967 = vmatprep.subr.mxu0 0.0
        %968 = vmatpush1.msra.mxu0 0.0
        %969 = vmatprep.subr.mxu0 0.0
        %970 = vmatpush1.msra.mxu0 0.0
        %971 = vmatprep.subr.mxu0 0.0
        %972 = vmatpush1.msra.mxu0 0.0
        %973 = vmatprep.subr.mxu0 0.0
        %974 = vmatpush1.msra.mxu0 0.0
        %975 = vmatprep.subr.mxu0 0.0
        %976 = vmatpush1.msra.mxu0 0.0
        %977 = vmatprep.subr.mxu0 0.0
        %978 = vmatpush1.msra.mxu0 0.0
        %979 = vmatprep.subr.mxu0 0.0
        %980 = vmatpush1.msra.mxu0 0.0
        %981 = vmatprep.subr.mxu0 0.0
        %982 = vmatpush1.msra.mxu0 0.0
        %983 = vmatprep.subr.mxu0 0.0
        %984 = vmatpush1.msra.mxu0 0.0
        %985 = vmatprep.subr.mxu0 0.0
        %986 = vmatpush1.msra.mxu0 0.0
        %987 = vmatprep.subr.mxu0 0.0
        %988 = vmatpush1.msra.mxu0 %v959
        %989 = vmatprep.subr.mxu0 0.0
        %990 = vmatpush1.msra.mxu0 %v944
        %991 = vmatprep.subr.mxu0 0.0
        %992 = vmatpush1.msra.mxu0 %v943
        %993 = vmatprep.subr.mxu0 0.0
        %994 = vmatpush2.msra.mxu0 0.0
        %995 = vmatprep.subr.mxu0 0.0
        %996 = vmatpush2.msra.mxu0 0.0
        %997 = vmatprep.subr.mxu0 0.0
        %998 = vmatpush2.msra.mxu0 0.0
        %999 = vmatprep.subr.mxu0 0.0
        %1000 = vmatpush2.msra.mxu0 0.0
        %1001 = vmatprep.subr.mxu0 0.0
        %1002 = vmatpush2.msra.mxu0 0.0
        %1003 = vmatprep.subr.mxu0 0.0
        %1004 = vmatpush2.msra.mxu0 0.0
        %1005 = vmatprep.subr.mxu0 0.0
        %1006 = vmatpush2.msra.mxu0 0.0
        %1007 = vmatprep.subr.mxu0 0.0
        %1008 = vmatpush2.msra.mxu0 0.0
        %1009 = vmatprep.subr.mxu0 0.0
        %1010 = vmatpush2.msra.mxu0 0.0
        %1011 = vmatprep.subr.mxu0 0.0
        %1012 = vmatpush2.msra.mxu0 0.0
        %1013 = vmatprep.subr.mxu0 0.0
        %1014 = vmatpush2.msra.mxu0 0.0
        %1015 = vmatprep.subr.mxu0 0.0
        %1016 = vmatpush2.msra.mxu0 0.0
        %1017 = vmatprep.subr.mxu0 0.0
        %1018 = vmatpush2.msra.mxu0 0.0
        %1019 = vmatprep.subr.mxu0 0.0
        %1020 = vmatpush2.msra.mxu0 0.0
        %1021 = vmatprep.subr.mxu0 0.0
        %1022 = vmatpush2.msra.mxu0 0.0
        %1023 = vmatprep.subr.mxu0 0.0
        %1024 = vmatpush2.msra.mxu0 0.0
        %1025 = vmatprep.mubr.f32.mxu0 0.0
        %1026 = vmatmul.mubr.f32.gmra.mxu0 %v947
        %v1027 = vpop.f32.mrf.mxu0
        %v1028 = vadd.f32 0.0, %v1027
        %v1029 = vpop.f32.mrf.mxu0
        %1030 = vmatprep.mubr.f32.mxu0 0.0
        %1031 = vmatmul.mubr.f32.gmra.mxu0 %v950
        %v1032 = vpop.f32.mrf.mxu0
        %v1033 = vadd.f32 0.0, %v1032
        %v1034 = vpop.f32.mrf.mxu0
        %1035 = vmatprep.mubr.f32.mxu0 0.0
        %1036 = vmatmul.mubr.f32.gmra.mxu0 %v953
        %v1037 = vpop.f32.mrf.mxu0
        %v1038 = vadd.f32 0.0, %v1037
        %v1039 = vpop.f32.mrf.mxu0
        %1040 = vmatprep.mubr.f32.mxu0 0.0
        %1041 = vmatmul.mubr.f32.gmra.mxu0 %v956
        %v1042 = vpop.f32.mrf.mxu0
        %v1043 = vadd.f32 0.0, %v1042
        %v1044 = vpop.f32.mrf.mxu0
        %1045 = vdwg.mxu0
        %v1046 = vadd.f32 %v938, %v1028
        %v1047 = vadd.f32 %v939, %v1033
        %v1048 = vadd.f32 %v940, %v1038
        %v1049 = vadd.f32 %v941, %v1043
        %s1050 = scalar_lea.vmem %s267, 3
        %v1051 = vld [vmem:[%s1050] ss:$4 sm:$0xff]
        %s1052 = scalar_lea.vmem %s267, 35
        %v1053 = vld [vmem:[%s1052] ss:$4 sm:$0xff]
        %s1054 = scalar_lea.vmem %s267, 67
        %v1055 = vld [vmem:[%s1054] ss:$4 sm:$0xff]
        %s1056 = scalar_lea.vmem %s267, 99
        %v1057 = vld [vmem:[%s1056] ss:$4 sm:$0xff]
        %s1058 = scalar_lea.vmem %s281, 3
        %v1059 = vld [vmem:[%s1058] ss:$4 sm:$0xff]
        %s1060 = scalar_lea.vmem %s281, 35
        %v1061 = vld [vmem:[%s1060] ss:$4 sm:$0xff]
        %s1062 = scalar_lea.vmem %s281, 67
        %v1063 = vld [vmem:[%s1062] ss:$4 sm:$0xff]
        %s1064 = scalar_lea.vmem %s281, 99
        %v1065 = vld [vmem:[%s1064] ss:$4 sm:$0xff]
        %v1066 = vadd.s32 %v317, 3
        %v1067 = vadd.s32 %v318, 3
        %v1068 = vadd.s32 %v319, 3
        %v1069 = vadd.s32 %v320, 3
        %vm1070 = vcmp.lt.s32.totalorder %v1066, 200
        %vm1071 = vcmp.lt.s32.totalorder %v1067, 200
        %vm1072 = vcmp.lt.s32.totalorder %v1068, 200
        %vm1073 = vcmp.lt.s32.totalorder %v1069, 200
        %v1074 = vsel %vm1070, 1, 0
        %v1075 = vsel %vm1071, 1, 0
        %v1076 = vsel %vm1072, 1, 0
        %v1077 = vsel %vm1073, 1, 0
        %vm1078 = vcmp.eq.s32.totalorder %v1074, 1
        %vm1079 = vcmp.eq.s32.totalorder %v1075, 1
        %vm1080 = vcmp.eq.s32.totalorder %v1076, 1
        %vm1081 = vcmp.eq.s32.totalorder %v1077, 1
        %v1082 = vsel %vm1078, %v1051, 0.0
        %v1083 = vsel %vm1079, %v1053, 0.0
        %v1084 = vsel %vm1080, %v1055, 0.0
        %v1085 = vsel %vm1081, %v1057, 0.0
        %v1086 = vsel %vm1078, %v1059, 0.0
        %v1087 = vsel %vm1079, %v1061, 0.0
        %v1088 = vsel %vm1080, %v1063, 0.0
        %v1089 = vsel %vm1081, %v1065, 0.0
        %s1090 = scalar_lea.vmem %s2, 48
        %v1091 = vld [vmem:[%s1090] sm:$0xff]
        %v1092 = vld [vmem:[%s1090 + $0x8] sm:$0xff]
        %v1094 = vsel %vm448, %v1082, 0
        %v1097 = vsel %vm448, %v1083, 0
        %v1100 = vsel %vm448, %v1084, 0
        %v1103 = vsel %vm448, %v1085, 0
        %1105 = vmatprep.subr.mxu0 0.0
        %1106 = vmatpush1.msra.mxu0 0.0
        %1107 = vmatprep.subr.mxu0 0.0
        %1108 = vmatpush1.msra.mxu0 0.0
        %1109 = vmatprep.subr.mxu0 0.0
        %1110 = vmatpush1.msra.mxu0 0.0
        %1111 = vmatprep.subr.mxu0 0.0
        %1112 = vmatpush1.msra.mxu0 0.0
        %1113 = vmatprep.subr.mxu0 0.0
        %1114 = vmatpush1.msra.mxu0 0.0
        %1115 = vmatprep.subr.mxu0 0.0
        %1116 = vmatpush1.msra.mxu0 0.0
        %1117 = vmatprep.subr.mxu0 0.0
        %1118 = vmatpush1.msra.mxu0 0.0
        %1119 = vmatprep.subr.mxu0 0.0
        %1120 = vmatpush1.msra.mxu0 0.0
        %1121 = vmatprep.subr.mxu0 0.0
        %1122 = vmatpush1.msra.mxu0 0.0
        %1123 = vmatprep.subr.mxu0 0.0
        %1124 = vmatpush1.msra.mxu0 0.0
        %1125 = vmatprep.subr.mxu0 0.0
        %1126 = vmatpush1.msra.mxu0 0.0
        %1127 = vmatprep.subr.mxu0 0.0
        %1128 = vmatpush1.msra.mxu0 0.0
        %1129 = vmatprep.subr.mxu0 0.0
        %1130 = vmatpush1.msra.mxu0 0.0
        %1131 = vmatprep.subr.mxu0 0.0
        %1132 = vmatpush1.msra.mxu0 0.0
        %1133 = vmatprep.subr.mxu0 0.0
        %1134 = vmatpush1.msra.mxu0 %v1092
        %1135 = vmatprep.subr.mxu0 0.0
        %1136 = vmatpush1.msra.mxu0 %v1091
        %1137 = vmatprep.subr.mxu0 0.0
        %1138 = vmatpush2.msra.mxu0 0.0
        %1139 = vmatprep.subr.mxu0 0.0
        %1140 = vmatpush2.msra.mxu0 0.0
        %1141 = vmatprep.subr.mxu0 0.0
        %1142 = vmatpush2.msra.mxu0 0.0
        %1143 = vmatprep.subr.mxu0 0.0
        %1144 = vmatpush2.msra.mxu0 0.0
        %1145 = vmatprep.subr.mxu0 0.0
        %1146 = vmatpush2.msra.mxu0 0.0
        %1147 = vmatprep.subr.mxu0 0.0
        %1148 = vmatpush2.msra.mxu0 0.0
        %1149 = vmatprep.subr.mxu0 0.0
        %1150 = vmatpush2.msra.mxu0 0.0
        %1151 = vmatprep.subr.mxu0 0.0
        %1152 = vmatpush2.msra.mxu0 0.0
        %1153 = vmatprep.subr.mxu0 0.0
        %1154 = vmatpush2.msra.mxu0 0.0
        %1155 = vmatprep.subr.mxu0 0.0
        %1156 = vmatpush2.msra.mxu0 0.0
        %1157 = vmatprep.subr.mxu0 0.0
        %1158 = vmatpush2.msra.mxu0 0.0
        %1159 = vmatprep.subr.mxu0 0.0
        %1160 = vmatpush2.msra.mxu0 0.0
        %1161 = vmatprep.subr.mxu0 0.0
        %1162 = vmatpush2.msra.mxu0 0.0
        %1163 = vmatprep.subr.mxu0 0.0
        %1164 = vmatpush2.msra.mxu0 0.0
        %1165 = vmatprep.subr.mxu0 0.0
        %1166 = vmatpush2.msra.mxu0 0.0
        %1167 = vmatprep.subr.mxu0 0.0
        %1168 = vmatpush2.msra.mxu0 0.0
        %1169 = vmatprep.mubr.f32.mxu0 0.0
        %1170 = vmatmul.mubr.f32.gmra.mxu0 %v1094
        %v1171 = vpop.f32.mrf.mxu0
        %v1172 = vadd.f32 0.0, %v1171
        %v1173 = vpop.f32.mrf.mxu0
        %1174 = vmatprep.mubr.f32.mxu0 0.0
        %1175 = vmatmul.mubr.f32.gmra.mxu0 %v1097
        %v1176 = vpop.f32.mrf.mxu0
        %v1177 = vadd.f32 0.0, %v1176
        %v1178 = vpop.f32.mrf.mxu0
        %1179 = vmatprep.mubr.f32.mxu0 0.0
        %1180 = vmatmul.mubr.f32.gmra.mxu0 %v1100
        %v1181 = vpop.f32.mrf.mxu0
        %v1182 = vadd.f32 0.0, %v1181
        %v1183 = vpop.f32.mrf.mxu0
        %1184 = vmatprep.mubr.f32.mxu0 0.0
        %1185 = vmatmul.mubr.f32.gmra.mxu0 %v1103
        %v1186 = vpop.f32.mrf.mxu0
        %v1187 = vadd.f32 0.0, %v1186
        %v1188 = vpop.f32.mrf.mxu0
        %1189 = vdwg.mxu0
        %v1190 = vadd.f32 %v1046, %v1172
        %v1191 = vadd.f32 %v1047, %v1177
        %v1192 = vadd.f32 %v1048, %v1182
        %v1193 = vadd.f32 %v1049, %v1187
        %s1194 = scalar_lea.vmem %s3, 72
        %v1195 = vld [vmem:[%s1194] sm:$0xff]
        %v1196 = vld [vmem:[%s1194 + $0x8] sm:$0xff]
        %v1197 = vld [vmem:[%s1194 + $0x10] sm:$0xf]
        %v1199 = vsel %vm346, %v1086, 0
        %v1202 = vsel %vm346, %v1087, 0
        %v1205 = vsel %vm346, %v1088, 0
        %v1208 = vsel %vm346, %v1089, 0
        %v1211 = vsel %vm359, %v1197, 0
        %1213 = vmatprep.subr.mxu0 0.0
        %1214 = vmatpush1.msra.mxu0 0.0
        %1215 = vmatprep.subr.mxu0 0.0
        %1216 = vmatpush1.msra.mxu0 0.0
        %1217 = vmatprep.subr.mxu0 0.0
        %1218 = vmatpush1.msra.mxu0 0.0
        %1219 = vmatprep.subr.mxu0 0.0
        %1220 = vmatpush1.msra.mxu0 0.0
        %1221 = vmatprep.subr.mxu0 0.0
        %1222 = vmatpush1.msra.mxu0 0.0
        %1223 = vmatprep.subr.mxu0 0.0
        %1224 = vmatpush1.msra.mxu0 0.0
        %1225 = vmatprep.subr.mxu0 0.0
        %1226 = vmatpush1.msra.mxu0 0.0
        %1227 = vmatprep.subr.mxu0 0.0
        %1228 = vmatpush1.msra.mxu0 0.0
        %1229 = vmatprep.subr.mxu0 0.0
        %1230 = vmatpush1.msra.mxu0 0.0
        %1231 = vmatprep.subr.mxu0 0.0
        %1232 = vmatpush1.msra.mxu0 0.0
        %1233 = vmatprep.subr.mxu0 0.0
        %1234 = vmatpush1.msra.mxu0 0.0
        %1235 = vmatprep.subr.mxu0 0.0
        %1236 = vmatpush1.msra.mxu0 0.0
        %1237 = vmatprep.subr.mxu0 0.0
        %1238 = vmatpush1.msra.mxu0 0.0
        %1239 = vmatprep.subr.mxu0 0.0
        %1240 = vmatpush1.msra.mxu0 %v1211
        %1241 = vmatprep.subr.mxu0 0.0
        %1242 = vmatpush1.msra.mxu0 %v1196
        %1243 = vmatprep.subr.mxu0 0.0
        %1244 = vmatpush1.msra.mxu0 %v1195
        %1245 = vmatprep.subr.mxu0 0.0
        %1246 = vmatpush2.msra.mxu0 0.0
        %1247 = vmatprep.subr.mxu0 0.0
        %1248 = vmatpush2.msra.mxu0 0.0
        %1249 = vmatprep.subr.mxu0 0.0
        %1250 = vmatpush2.msra.mxu0 0.0
        %1251 = vmatprep.subr.mxu0 0.0
        %1252 = vmatpush2.msra.mxu0 0.0
        %1253 = vmatprep.subr.mxu0 0.0
        %1254 = vmatpush2.msra.mxu0 0.0
        %1255 = vmatprep.subr.mxu0 0.0
        %1256 = vmatpush2.msra.mxu0 0.0
        %1257 = vmatprep.subr.mxu0 0.0
        %1258 = vmatpush2.msra.mxu0 0.0
        %1259 = vmatprep.subr.mxu0 0.0
        %1260 = vmatpush2.msra.mxu0 0.0
        %1261 = vmatprep.subr.mxu0 0.0
        %1262 = vmatpush2.msra.mxu0 0.0
        %1263 = vmatprep.subr.mxu0 0.0
        %1264 = vmatpush2.msra.mxu0 0.0
        %1265 = vmatprep.subr.mxu0 0.0
        %1266 = vmatpush2.msra.mxu0 0.0
        %1267 = vmatprep.subr.mxu0 0.0
        %1268 = vmatpush2.msra.mxu0 0.0
        %1269 = vmatprep.subr.mxu0 0.0
        %1270 = vmatpush2.msra.mxu0 0.0
        %1271 = vmatprep.subr.mxu0 0.0
        %1272 = vmatpush2.msra.mxu0 0.0
        %1273 = vmatprep.subr.mxu0 0.0
        %1274 = vmatpush2.msra.mxu0 0.0
        %1275 = vmatprep.subr.mxu0 0.0
        %1276 = vmatpush2.msra.mxu0 0.0
        %1277 = vmatprep.mubr.f32.mxu0 0.0
        %1278 = vmatmul.mubr.f32.gmra.mxu0 %v1199
        %v1279 = vpop.f32.mrf.mxu0
        %v1280 = vadd.f32 0.0, %v1279
        %v1281 = vpop.f32.mrf.mxu0
        %1282 = vmatprep.mubr.f32.mxu0 0.0
        %1283 = vmatmul.mubr.f32.gmra.mxu0 %v1202
        %v1284 = vpop.f32.mrf.mxu0
        %v1285 = vadd.f32 0.0, %v1284
        %v1286 = vpop.f32.mrf.mxu0
        %1287 = vmatprep.mubr.f32.mxu0 0.0
        %1288 = vmatmul.mubr.f32.gmra.mxu0 %v1205
        %v1289 = vpop.f32.mrf.mxu0
        %v1290 = vadd.f32 0.0, %v1289
        %v1291 = vpop.f32.mrf.mxu0
        %1292 = vmatprep.mubr.f32.mxu0 0.0
        %1293 = vmatmul.mubr.f32.gmra.mxu0 %v1208
        %v1294 = vpop.f32.mrf.mxu0
        %v1295 = vadd.f32 0.0, %v1294
        %v1296 = vpop.f32.mrf.mxu0
        %1297 = vdwg.mxu0
        %v1298 = vadd.f32 %v1190, %v1280
        %v1299 = vadd.f32 %v1191, %v1285
        %v1300 = vadd.f32 %v1192, %v1290
        %v1301 = vadd.f32 %v1193, %v1295
        %v1302 = vld [vmem:[%s4] sm:$0x1]
        %v1304 = vlaneseq
        %v1305 = vshrl.u32 %v1304, 7
        %v1306 = vsub.s32 0, %v1305
        %v1307 = vrot.slane %v1302, %v1306
        %v1309 = vadd.f32 %v1298, %v1307
        %v1310 = vadd.f32 %v1299, %v1307
        %v1311 = vadd.f32 %v1300, %v1307
        %v1312 = vadd.f32 %v1301, %v1307
        %1313 = vst [vmem:[%s258] sm:$0xff] %v1309
        %1314 = vst [vmem:[%s258 + $0x8] sm:$0xff] %v1310
        %1315 = vst [vmem:[%s258 + $0x10] sm:$0xff] %v1311
        %1316 = vst [vmem:[%s258 + $0x18] sm:$0xff] %v1312
        %s1317 = sand.u32 %s142, 1
        %s1318 = scalar_lea.sflag [#allocation3], %s1317
        %s1319 = sand.u32 %s142, 1
        %s1320 = smul.addr %s1319, 32
        %s1321 = scalar_lea.vmem [#allocation2], %s1320
        // Predicated region
        $region41: #{tpu_custom_call.1} parent=39 // pred_check
          %p1322 = pneg %p152
        $region42: #{tpu_custom_call.1} parent=39 // pred_check_branch
          %1324 = sbr.rel (%p1322) target = $region44
        $region43: #{tpu_custom_call.1} parent=39 // pred_region
          %s1325 = smul.u32 4, %s19
          %s1326 = ssub.s32 7, %s1325
          %p1327 = scmp.lt.s32.totalorder %s1326, 4
          %s1328 = scalar_select %p1327, %s1326, 4
          %s1329 = smul.u32 128, %s1328
          %s1331 = ssub.s32 512, %s1329
          %1332 = vsyncadd %s1318, %s1331
          %p1333 = scmp.ne.s32.totalorder 0, %s1329
          %s1334 = smul.addr %s1325, 128
          %s1335 = scalar_lea.hbm %s5, %s1334
          %s1336 = smul.u32 8, %s1328
          %s1337 = sshll.u32 %s1321, 4
          %s1338 = int_to_ptr.vmem [resolvable:$true] %s1337
          %s1339 = sshll.u32 %s1336, 4
          %1343 = dma.vmem_to_hbm [thread:$0]  (%p1333), %s1338, %s1339, %s1335, %s1318, 128, 128, 8
        $region44: #{tpu_custom_call.1} parent=39 // pred_fallthru
          _
      $region40: #{tpu_custom_call.1} parent=5 // pred_fallthru
        _
      %p1344 = scmp.le.s32.totalorder 2, %s14
      // Predicated region
      $region45: #{tpu_custom_call.1} parent=5 // pred_check
        %p1345 = pneg %p1344
      $region46: #{tpu_custom_call.1} parent=5 // pred_check_branch
        %1347 = sbr.rel (%p1345) target = $region48
      $region47: #{tpu_custom_call.1} parent=5 // pred_region
        %s1348 = ssub.s32 %s14, 2
        // Predicated region
        $region49: #{tpu_custom_call.1} parent=47 // pred_check
          %p1349 = pneg %p158
        $region50: #{tpu_custom_call.1} parent=47 // pred_check_branch
          %1351 = sbr.rel (%p1349) target = $region52
        $region51: #{tpu_custom_call.1} parent=47 // pred_region
          %s1352 = sand.u32 %s143, 1
          %s1353 = scalar_lea.sflag [#allocation3], %s1352
          %s1354 = sand.u32 %s143, 1
          %s1355 = smul.addr %s1354, 32
          %s1356 = scalar_lea.vmem [#allocation2], %s1355
          %1357 = dma.done %s1353, 512
        $region52: #{tpu_custom_call.1} parent=47 // pred_fallthru
          _
      $region48: #{tpu_custom_call.1} parent=5 // pred_fallthru
        _
    $region6: #{tpu_custom_call.1} parent=1 // loop_footer
      %s18 = sadd.s32 1, %s14
    $region7: #{tpu_custom_call.1} parent=1 // loop_footer_branch
      %13 = sbr.rel target = $region3
    $region8: #{tpu_custom_call.1} parent=1 // loop_exit
      _
    %1358 = vsyncpa [#allocation3], 1
    %s1359 = scalar_lea.sflag [#allocation3], 1
    %1360 = vsyncpa %s1359, 1

</llo_original>
